<compile_context>
chip_gen: v7x
topology: tpu7x:2x2x1
jax: 0.10.0
libtpu: 0.0.40
codegen_flags: <defaults>
</compile_context>

<pallas_src>
import jax
import jax.numpy as jnp
from jax import lax
from jax.experimental import pallas as pl
from jax.experimental.pallas import tpu as pltpu


def make_bottleneck_kernel(H, W, C1, Cm, C2, add, pad_lanes=128):
    """Fused Bottleneck kernel for one image (grid step = one batch element).

    All activations are laid out (channels, H*W): spatial on the 128-lane
    axis, channels on sublanes / the matmul contraction dim.
    """
    HW = H * W
    assert pad_lanes >= W + 1, "halo pad must cover a +/-(W+1) lane shift"
    # NOTE: HW and pad_lanes are multiples of 128 here, so every scratch store
    # below is lane-tile aligned (only the tap *loads* are at shifted offsets).

    def kernel(x_ref, w1_ref, b1_ref, w2_ref, b2_ref, o_ref, ypad_ref):
        x = x_ref[0]                                   # (C1, HW), f32

        # ---- cv1: 1x1 conv (+ folded BN) as one channel matmul, then SiLU --
        y1 = jnp.dot(w1_ref[...], x, preferred_element_type=jnp.float32)
        y1 = y1 + b1_ref[...]                          # (Cm, HW) + (Cm, 1)
        y1 = y1 * jax.nn.sigmoid(y1)                   # SiLU

        # ---- stage y1 into the lane-padded scratch --------------------------
        # Only the two halo pads are (re)zeroed (2 x (Cm, 128) vregs per step,
        # safe regardless of which TensorCore runs the step); the interior is
        # fully overwritten each step, so there is no full-buffer clear.
        zero_pad = jnp.zeros((Cm, pad_lanes), jnp.float32)
        ypad_ref[:, :pad_lanes] = zero_pad
        ypad_ref[:, pad_lanes + HW:] = zero_pad
        ypad_ref[:, pad_lanes:pad_lanes + HW] = y1     # aligned, unmasked vst

        # Column-validity masks for the flattened-HW row wrap (w -> w +/- 1).
        col = lax.broadcasted_iota(jnp.int32, (Cm, HW), 1) % W
        mask_l = col >= 1          # tap reads pixel (h + dh, w - 1)
        mask_r = col <= W - 2      # tap reads pixel (h + dh, w + 1)

        # ---- cv2: 3x3 SAME conv as 9 shifted-tap matmuls --------------------
        # Out-of-image rows read back as zeros from the halo pads; only the
        # row-wrap columns need masking.  Accumulate in f32 (first dot
        # initializes the accumulator); the folded-BN bias is added once at
        # the end instead of broadcasting it up front.
        acc = None
        for kh in range(3):
            for kw in range(3):
                off = (kh - 1) * W + (kw - 1)
                start = pad_lanes + off
                tap = ypad_ref[:, start:start + HW]    # (Cm, HW)
                if kw == 0:
                    tap = jnp.where(mask_l, tap, 0.0)
                elif kw == 2:
                    tap = jnp.where(mask_r, tap, 0.0)
                part = jnp.dot(w2_ref[kh, kw], tap,
                               preferred_element_type=jnp.float32)
                acc = part if acc is None else acc + part
        z = acc + b2_ref[...]                          # (C2, HW) + (C2, 1)
        z = z * jax.nn.sigmoid(z)                      # SiLU

        if add:
            z = z + x                                  # residual (C1 == C2)
        o_ref[0] = z.astype(o_ref.dtype)               # lane-dense store

    return kernel


def bottleneck_forward(x_nchw, w1t, b1, w2t, b2, add):
    """x_nchw: (N, C1, H, W);  w1t: (Cm, C1);  b1: (Cm, 1);
    w2t: (3, 3, C2, Cm);  b2: (C2, 1)."""
    N, C1, H, W = x_nchw.shape
    Cm = w1t.shape[0]
    C2 = w2t.shape[2]
    HW = H * W
    PAD = 128                                    # lane-tile aligned halo

    # NCHW -> (N, C, H*W): pure reshape (contiguous, no transpose); the H*W
    # axis rides the 128-lane dimension inside the kernel.
    x_flat = x_nchw.reshape(N, C1, HW)

    kernel = make_bottleneck_kernel(H, W, C1, Cm, C2, add, PAD)

    flops = 2 * N * HW * (C1 * Cm + 9 * Cm * C2)
    transcendentals = N * HW * (Cm + C2)         # the two SiLU sigmoids
    bytes_accessed = 4 * (x_flat.size + N * C2 * HW
                          + w1t.size + b1.size + w2t.size + b2.size)

    out = pl.pallas_call(
        kernel,
        out_shape=jax.ShapeDtypeStruct((N, C2, HW), x_nchw.dtype),
        grid_spec=pltpu.PrefetchScalarGridSpec(
            num_scalar_prefetch=0,
            grid=(N,),
            in_specs=[
                pl.BlockSpec((1, C1, HW), lambda n: (n, 0, 0)),
                pl.BlockSpec((Cm, C1), lambda n: (0, 0)),
                pl.BlockSpec((Cm, 1), lambda n: (0, 0)),
                pl.BlockSpec((3, 3, C2, Cm), lambda n: (0, 0, 0, 0)),
                pl.BlockSpec((C2, 1), lambda n: (0, 0)),
            ],
            out_specs=pl.BlockSpec((1, C2, HW), lambda n: (n, 0, 0)),
            scratch_shapes=[pltpu.VMEM((Cm, 2 * PAD + HW), jnp.float32)],
        ),
        compiler_params=pltpu.CompilerParams(
            dimension_semantics=("parallel",),
        ),
        cost_estimate=pl.CostEstimate(
            flops=flops,
            transcendentals=transcendentals,
            bytes_accessed=bytes_accessed,
        ),
    )(x_flat, w1t, b1, w2t, b2)

    # TODO(synk): for real YOLO feature maps (e.g. 80x80x256) add a row-strip
    # grid axis with a 1-row halo plus bf16 staging so the per-step working
    # set fits v7x's 64 MiB VMEM and both TensorCores stay busy at batch=1.
    return out.reshape(N, C2, H, W)


def silu(x):
    return x * jax.nn.sigmoid(x)


def reference_forward(x_nchw, conv1_w, conv2_w, bn1, bn2, eps, add):
    """Pure-JAX NCHW reference mirroring the PyTorch Bottleneck (eval mode)."""
    def conv_bn_silu(x, w, bn):
        gamma, beta, mean, var = bn
        y = lax.conv_general_dilated(
            x, w, window_strides=(1, 1), padding="SAME",
            dimension_numbers=("NCHW", "OIHW", "NCHW"),
            precision=lax.Precision.HIGHEST)
        scale = gamma / jnp.sqrt(var + eps)
        y = y * scale[None, :, None, None] \
            + (beta - mean * scale)[None, :, None, None]
        return silu(y)

    z = conv_bn_silu(conv_bn_silu(x_nchw, conv1_w, bn1), conv2_w, bn2)
    return x_nchw + z if add else z


if __name__ == "__main__":
    # Bottleneck(c1=4, c2=4, shortcut=True, g=1, e=0.5)  ->  c_ = 2
    N, C1, H, W = 2, 4, 16, 16
    C2 = 4
    E = 0.5
    Cm = int(C2 * E)
    shortcut = True
    add = shortcut and (C1 == C2)
    eps = 0.001

    key = jax.random.PRNGKey(0)
    k1, k2, kx = jax.random.split(key, 3)

    # Deterministic synthetic parameters (PyTorch weight layouts, OIHW).
    conv1_w = jax.random.normal(k1, (Cm, C1, 1, 1), jnp.float32) * 0.3
    conv2_w = jax.random.normal(k2, (C2, Cm, 3, 3), jnp.float32) * 0.3

    bn1 = (1.0 + 0.10 * jnp.arange(Cm, dtype=jnp.float32),
           0.05 * jnp.arange(Cm, dtype=jnp.float32),
           0.01 * jnp.arange(Cm, dtype=jnp.float32),
           1.0 + 0.02 * jnp.arange(Cm, dtype=jnp.float32))
    bn2 = (1.0 + 0.10 * jnp.arange(C2, dtype=jnp.float32),
           0.05 * jnp.arange(C2, dtype=jnp.float32),
           0.01 * jnp.arange(C2, dtype=jnp.float32),
           1.0 + 0.02 * jnp.arange(C2, dtype=jnp.float32))

    # Fold BN (inference) into conv weights/biases, channel-major layouts.
    g1, bt1, m1, v1 = bn1
    scale1 = g1 / jnp.sqrt(v1 + eps)
    w1t = conv1_w[:, :, 0, 0] * scale1[:, None]                  # (Cm, C1)
    b1 = (bt1 - m1 * scale1)[:, None]                            # (Cm, 1)

    g2, bt2, m2, v2 = bn2
    scale2 = g2 / jnp.sqrt(v2 + eps)
    w2t = jnp.transpose(conv2_w * scale2[:, None, None, None],
                        (2, 3, 0, 1))                            # (3,3,C2,Cm)
    b2 = (bt2 - m2 * scale2)[:, None]                            # (C2, 1)

    # Input in native PyTorch NCHW layout.
    x_nchw = jax.random.normal(kx, (N, C1, H, W), jnp.float32)

    out = bottleneck_forward(x_nchw, w1t, b1, w2t, b2, add)
    out = jax.block_until_ready(out)

    # Correctness check against the pure-JAX reference of the PyTorch module.
    ref = reference_forward(x_nchw, conv1_w, conv2_w, bn1, bn2, eps, add)
    max_err = float(jnp.max(jnp.abs(out - ref)))
    assert jnp.allclose(out, ref, atol=1e-4, rtol=1e-4), max_err

    print("KERNEL_OK")
</pallas_src>

<mosaic_0001>
module attributes {stable_mosaic.version = 11 : i64} {
  func.func @kernel(%arg0: i32, %arg1: memref<1x4x256xf32, #tpu.memory_space<vmem>>, %arg2: memref<2x4xf32, #tpu.memory_space<vmem>>, %arg3: memref<2x1xf32, #tpu.memory_space<vmem>>, %arg4: memref<3x3x4x2xf32, #tpu.memory_space<vmem>>, %arg5: memref<4x1xf32, #tpu.memory_space<vmem>>, %arg6: memref<1x4x256xf32, #tpu.memory_space<vmem>>, %arg7: memref<2x512xf32, #tpu.memory_space<vmem>>) attributes {dimension_semantics = [#tpu.dimension_semantics<parallel>], iteration_bounds = array<i64: 2>, scalar_prefetch = 0 : i64, scratch_operands = 1 : i64, tpu.core_type = #tpu.core_type<tc>, window_params = [{transform_indices = @transform_0, window_bounds = array<i64: 1, 4, 256>}, {pipeline_mode = #tpu.pipeline_mode<synchronous>, transform_indices = @transform_1, window_bounds = array<i64: 2, 4>}, {pipeline_mode = #tpu.pipeline_mode<synchronous>, transform_indices = @transform_2, window_bounds = array<i64: 2, 1>}, {pipeline_mode = #tpu.pipeline_mode<synchronous>, transform_indices = @transform_3, window_bounds = array<i64: 3, 3, 4, 2>}, {pipeline_mode = #tpu.pipeline_mode<synchronous>, transform_indices = @transform_4, window_bounds = array<i64: 4, 1>}, {transform_indices = @transform_5, window_bounds = array<i64: 1, 4, 256>}]} {
    %c0 = arith.constant 0 : index
    %c0_0 = arith.constant 0 : index
    %c0_1 = arith.constant 0 : index
    %0 = vector.load %arg1[%c0, %c0_0, %c0_1] : memref<1x4x256xf32, #tpu.memory_space<vmem>>, vector<1x4x256xf32>
    %1 = vector.shape_cast %0 : vector<1x4x256xf32> to vector<4x256xf32>
    %c0_2 = arith.constant 0 : index
    %c0_3 = arith.constant 0 : index
    %2 = vector.load %arg2[%c0_2, %c0_3] : memref<2x4xf32, #tpu.memory_space<vmem>>, vector<2x4xf32>
    %cst = arith.constant dense<0.000000e+00> : vector<2x256xf32>
    %3 = tpu.matmul %2, %1, %cst {dimension_numbers = #tpu.dot_dimension_numbers<[1], [0], [0], [1], [0, 0, 1, 1], [], []>} : vector<2x4xf32>, vector<4x256xf32>, vector<2x256xf32> -> vector<2x256xf32>
    %c0_4 = arith.constant 0 : index
    %c0_5 = arith.constant 0 : index
    %4 = vector.load %arg3[%c0_4, %c0_5] : memref<2x1xf32, #tpu.memory_space<vmem>>, vector<2x1xf32>
    %5 = vector.broadcast %4 : vector<2x1xf32> to vector<2x256xf32>
    %6 = arith.addf %3, %5 : vector<2x256xf32>
    %7 = arith.negf %6 : vector<2x256xf32>
    %8 = math.exp %7 : vector<2x256xf32>
    %cst_6 = arith.constant 1.000000e+00 : f32
    %9 = vector.broadcast %cst_6 : f32 to vector<2x256xf32>
    %10 = arith.addf %9, %8 : vector<2x256xf32>
    %11 = arith.divf %9, %10 : vector<2x256xf32>
    %12 = arith.mulf %6, %11 : vector<2x256xf32>
    %cst_7 = arith.constant 0.000000e+00 : f32
    %13 = vector.broadcast %cst_7 : f32 to vector<2x128xf32>
    %c0_8 = arith.constant 0 : index
    %c0_9 = arith.constant 0 : index
    %14 = vector.load %arg7[%c0_8, %c0_9] : memref<2x512xf32, #tpu.memory_space<vmem>>, vector<2x128xf32>
    tpu.vector_store %arg7[%c0_8, %c0_9], %13 {strides = array<i32>} : memref<2x512xf32, #tpu.memory_space<vmem>>, vector<2x128xf32>,
    %c0_10 = arith.constant 0 : index
    %c384 = arith.constant 384 : index
    %15 = vector.load %arg7[%c0_10, %c384] : memref<2x512xf32, #tpu.memory_space<vmem>>, vector<2x128xf32>
    tpu.vector_store %arg7[%c0_10, %c384], %13 {strides = array<i32>} : memref<2x512xf32, #tpu.memory_space<vmem>>, vector<2x128xf32>,
    %c0_11 = arith.constant 0 : index
    %c128 = arith.constant 128 : index
    %16 = vector.load %arg7[%c0_11, %c128] : memref<2x512xf32, #tpu.memory_space<vmem>>, vector<2x256xf32>
    tpu.vector_store %arg7[%c0_11, %c128], %12 {strides = array<i32>} : memref<2x512xf32, #tpu.memory_space<vmem>>, vector<2x256xf32>,
    %17 = tpu.iota {dimensions = array<i32: 1>} : vector<2x256xi32>
    %c16_i32 = arith.constant 16 : i32
    %c0_i32 = arith.constant 0 : i32
    %18 = arith.cmpi eq, %c16_i32, %c0_i32 : i32
    %c1_i32 = arith.constant 1 : i32
    %19 = arith.select %18, %c1_i32, %c16_i32 : i32
    %20 = vector.broadcast %19 : i32 to vector<2x256xi32>
    %21 = arith.remsi %17, %20 : vector<2x256xi32>
    %c0_i32_12 = arith.constant 0 : i32
    %22 = vector.broadcast %c0_i32_12 : i32 to vector<2x256xi32>
    %23 = arith.cmpi ne, %21, %22 : vector<2x256xi32>
    %c0_i32_13 = arith.constant 0 : i32
    %24 = vector.broadcast %c0_i32_13 : i32 to vector<2x256xi32>
    %25 = arith.cmpi slt, %21, %24 : vector<2x256xi32>
    %c0_i32_14 = arith.constant 0 : i32
    %26 = arith.cmpi slt, %19, %c0_i32_14 : i32
    %27 = vector.broadcast %26 : i1 to vector<2x256xi1>
    %28 = vector.broadcast %27 : vector<2x256xi1> to vector<2x256xi1>
    %29 = arith.xori %25, %28 : vector<2x256xi1>
    %30 = arith.andi %29, %23 : vector<2x256xi1>
    %31 = vector.broadcast %19 : i32 to vector<2x256xi32>
    %32 = arith.addi %21, %31 : vector<2x256xi32>
    %33 = arith.select %30, %32, %21 : vector<2x256xi1>, vector<2x256xi32>
    %c1_i32_15 = arith.constant 1 : i32
    %34 = vector.broadcast %c1_i32_15 : i32 to vector<2x256xi32>
    %35 = arith.cmpi sge, %33, %34 : vector<2x256xi32>
    %c14_i32 = arith.constant 14 : i32
    %36 = vector.broadcast %c14_i32 : i32 to vector<2x256xi32>
    %37 = arith.cmpi sle, %33, %36 : vector<2x256xi32>
    %c0_16 = arith.constant 0 : index
    %c111 = arith.constant 111 : index
    %38 = vector.load %arg7[%c0_16, %c111] : memref<2x512xf32, #tpu.memory_space<vmem>>, vector<2x256xf32>
    %cst_17 = arith.constant 0.000000e+00 : f32
    %39 = vector.broadcast %cst_17 : f32 to vector<2x256xf32>
    %40 = arith.select %35, %38, %39 : vector<2x256xi1>, vector<2x256xf32>
    %c0_18 = arith.constant 0 : index
    %c0_19 = arith.constant 0 : index
    %c0_20 = arith.constant 0 : index
    %c0_21 = arith.constant 0 : index
    %41 = vector.load %arg4[%c0_18, %c0_19, %c0_20, %c0_21] : memref<3x3x4x2xf32, #tpu.memory_space<vmem>>, vector<1x1x4x2xf32>
    %42 = vector.shape_cast %41 : vector<1x1x4x2xf32> to vector<4x2xf32>
    %cst_22 = arith.constant dense<0.000000e+00> : vector<4x256xf32>
    %43 = tpu.matmul %42, %40, %cst_22 {dimension_numbers = #tpu.dot_dimension_numbers<[1], [0], [0], [1], [0, 0, 1, 1], [], []>} : vector<4x2xf32>, vector<2x256xf32>, vector<4x256xf32> -> vector<4x256xf32>
    %c0_23 = arith.constant 0 : index
    %c112 = arith.constant 112 : index
    %44 = vector.load %arg7[%c0_23, %c112] : memref<2x512xf32, #tpu.memory_space<vmem>>, vector<2x256xf32>
    %c0_24 = arith.constant 0 : index
    %c1 = arith.constant 1 : index
    %c0_25 = arith.constant 0 : index
    %c0_26 = arith.constant 0 : index
    %45 = vector.load %arg4[%c0_24, %c1, %c0_25, %c0_26] : memref<3x3x4x2xf32, #tpu.memory_space<vmem>>, vector<1x1x4x2xf32>
    %46 = vector.shape_cast %45 : vector<1x1x4x2xf32> to vector<4x2xf32>
    %cst_27 = arith.constant dense<0.000000e+00> : vector<4x256xf32>
    %47 = tpu.matmul %46, %44, %cst_27 {dimension_numbers = #tpu.dot_dimension_numbers<[1], [0], [0], [1], [0, 0, 1, 1], [], []>} : vector<4x2xf32>, vector<2x256xf32>, vector<4x256xf32> -> vector<4x256xf32>
    %48 = arith.addf %43, %47 : vector<4x256xf32>
    %c0_28 = arith.constant 0 : index
    %c113 = arith.constant 113 : index
    %49 = vector.load %arg7[%c0_28, %c113] : memref<2x512xf32, #tpu.memory_space<vmem>>, vector<2x256xf32>
    %cst_29 = arith.constant 0.000000e+00 : f32
    %50 = vector.broadcast %cst_29 : f32 to vector<2x256xf32>
    %51 = arith.select %37, %49, %50 : vector<2x256xi1>, vector<2x256xf32>
    %c0_30 = arith.constant 0 : index
    %c2 = arith.constant 2 : index
    %c0_31 = arith.constant 0 : index
    %c0_32 = arith.constant 0 : index
    %52 = vector.load %arg4[%c0_30, %c2, %c0_31, %c0_32] : memref<3x3x4x2xf32, #tpu.memory_space<vmem>>, vector<1x1x4x2xf32>
    %53 = vector.shape_cast %52 : vector<1x1x4x2xf32> to vector<4x2xf32>
    %cst_33 = arith.constant dense<0.000000e+00> : vector<4x256xf32>
    %54 = tpu.matmul %53, %51, %cst_33 {dimension_numbers = #tpu.dot_dimension_numbers<[1], [0], [0], [1], [0, 0, 1, 1], [], []>} : vector<4x2xf32>, vector<2x256xf32>, vector<4x256xf32> -> vector<4x256xf32>
    %55 = arith.addf %48, %54 : vector<4x256xf32>
    %c0_34 = arith.constant 0 : index
    %c127 = arith.constant 127 : index
    %56 = vector.load %arg7[%c0_34, %c127] : memref<2x512xf32, #tpu.memory_space<vmem>>, vector<2x256xf32>
    %cst_35 = arith.constant 0.000000e+00 : f32
    %57 = vector.broadcast %cst_35 : f32 to vector<2x256xf32>
    %58 = arith.select %35, %56, %57 : vector<2x256xi1>, vector<2x256xf32>
    %c1_36 = arith.constant 1 : index
    %c0_37 = arith.constant 0 : index
    %c0_38 = arith.constant 0 : index
    %c0_39 = arith.constant 0 : index
    %59 = vector.load %arg4[%c1_36, %c0_37, %c0_38, %c0_39] : memref<3x3x4x2xf32, #tpu.memory_space<vmem>>, vector<1x1x4x2xf32>
    %60 = vector.shape_cast %59 : vector<1x1x4x2xf32> to vector<4x2xf32>
    %cst_40 = arith.constant dense<0.000000e+00> : vector<4x256xf32>
    %61 = tpu.matmul %60, %58, %cst_40 {dimension_numbers = #tpu.dot_dimension_numbers<[1], [0], [0], [1], [0, 0, 1, 1], [], []>} : vector<4x2xf32>, vector<2x256xf32>, vector<4x256xf32> -> vector<4x256xf32>
    %62 = arith.addf %55, %61 : vector<4x256xf32>
    %c0_41 = arith.constant 0 : index
    %c128_42 = arith.constant 128 : index
    %63 = vector.load %arg7[%c0_41, %c128_42] : memref<2x512xf32, #tpu.memory_space<vmem>>, vector<2x256xf32>
    %c1_43 = arith.constant 1 : index
    %c1_44 = arith.constant 1 : index
    %c0_45 = arith.constant 0 : index
    %c0_46 = arith.constant 0 : index
    %64 = vector.load %arg4[%c1_43, %c1_44, %c0_45, %c0_46] : memref<3x3x4x2xf32, #tpu.memory_space<vmem>>, vector<1x1x4x2xf32>
    %65 = vector.shape_cast %64 : vector<1x1x4x2xf32> to vector<4x2xf32>
    %cst_47 = arith.constant dense<0.000000e+00> : vector<4x256xf32>
    %66 = tpu.matmul %65, %63, %cst_47 {dimension_numbers = #tpu.dot_dimension_numbers<[1], [0], [0], [1], [0, 0, 1, 1], [], []>} : vector<4x2xf32>, vector<2x256xf32>, vector<4x256xf32> -> vector<4x256xf32>
    %67 = arith.addf %62, %66 : vector<4x256xf32>
    %c0_48 = arith.constant 0 : index
    %c129 = arith.constant 129 : index
    %68 = vector.load %arg7[%c0_48, %c129] : memref<2x512xf32, #tpu.memory_space<vmem>>, vector<2x256xf32>
    %cst_49 = arith.constant 0.000000e+00 : f32
    %69 = vector.broadcast %cst_49 : f32 to vector<2x256xf32>
    %70 = arith.select %37, %68, %69 : vector<2x256xi1>, vector<2x256xf32>
    %c1_50 = arith.constant 1 : index
    %c2_51 = arith.constant 2 : index
    %c0_52 = arith.constant 0 : index
    %c0_53 = arith.constant 0 : index
    %71 = vector.load %arg4[%c1_50, %c2_51, %c0_52, %c0_53] : memref<3x3x4x2xf32, #tpu.memory_space<vmem>>, vector<1x1x4x2xf32>
    %72 = vector.shape_cast %71 : vector<1x1x4x2xf32> to vector<4x2xf32>
    %cst_54 = arith.constant dense<0.000000e+00> : vector<4x256xf32>
    %73 = tpu.matmul %72, %70, %cst_54 {dimension_numbers = #tpu.dot_dimension_numbers<[1], [0], [0], [1], [0, 0, 1, 1], [], []>} : vector<4x2xf32>, vector<2x256xf32>, vector<4x256xf32> -> vector<4x256xf32>
    %74 = arith.addf %67, %73 : vector<4x256xf32>
    %c0_55 = arith.constant 0 : index
    %c143 = arith.constant 143 : index
    %75 = vector.load %arg7[%c0_55, %c143] : memref<2x512xf32, #tpu.memory_space<vmem>>, vector<2x256xf32>
    %cst_56 = arith.constant 0.000000e+00 : f32
    %76 = vector.broadcast %cst_56 : f32 to vector<2x256xf32>
    %77 = arith.select %35, %75, %76 : vector<2x256xi1>, vector<2x256xf32>
    %c2_57 = arith.constant 2 : index
    %c0_58 = arith.constant 0 : index
    %c0_59 = arith.constant 0 : index
    %c0_60 = arith.constant 0 : index
    %78 = vector.load %arg4[%c2_57, %c0_58, %c0_59, %c0_60] : memref<3x3x4x2xf32, #tpu.memory_space<vmem>>, vector<1x1x4x2xf32>
    %79 = vector.shape_cast %78 : vector<1x1x4x2xf32> to vector<4x2xf32>
    %cst_61 = arith.constant dense<0.000000e+00> : vector<4x256xf32>
    %80 = tpu.matmul %79, %77, %cst_61 {dimension_numbers = #tpu.dot_dimension_numbers<[1], [0], [0], [1], [0, 0, 1, 1], [], []>} : vector<4x2xf32>, vector<2x256xf32>, vector<4x256xf32> -> vector<4x256xf32>
    %81 = arith.addf %74, %80 : vector<4x256xf32>
    %c0_62 = arith.constant 0 : index
    %c144 = arith.constant 144 : index
    %82 = vector.load %arg7[%c0_62, %c144] : memref<2x512xf32, #tpu.memory_space<vmem>>, vector<2x256xf32>
    %c2_63 = arith.constant 2 : index
    %c1_64 = arith.constant 1 : index
    %c0_65 = arith.constant 0 : index
    %c0_66 = arith.constant 0 : index
    %83 = vector.load %arg4[%c2_63, %c1_64, %c0_65, %c0_66] : memref<3x3x4x2xf32, #tpu.memory_space<vmem>>, vector<1x1x4x2xf32>
    %84 = vector.shape_cast %83 : vector<1x1x4x2xf32> to vector<4x2xf32>
    %cst_67 = arith.constant dense<0.000000e+00> : vector<4x256xf32>
    %85 = tpu.matmul %84, %82, %cst_67 {dimension_numbers = #tpu.dot_dimension_numbers<[1], [0], [0], [1], [0, 0, 1, 1], [], []>} : vector<4x2xf32>, vector<2x256xf32>, vector<4x256xf32> -> vector<4x256xf32>
    %86 = arith.addf %81, %85 : vector<4x256xf32>
    %c0_68 = arith.constant 0 : index
    %c145 = arith.constant 145 : index
    %87 = vector.load %arg7[%c0_68, %c145] : memref<2x512xf32, #tpu.memory_space<vmem>>, vector<2x256xf32>
    %cst_69 = arith.constant 0.000000e+00 : f32
    %88 = vector.broadcast %cst_69 : f32 to vector<2x256xf32>
    %89 = arith.select %37, %87, %88 : vector<2x256xi1>, vector<2x256xf32>
    %c2_70 = arith.constant 2 : index
    %c2_71 = arith.constant 2 : index
    %c0_72 = arith.constant 0 : index
    %c0_73 = arith.constant 0 : index
    %90 = vector.load %arg4[%c2_70, %c2_71, %c0_72, %c0_73] : memref<3x3x4x2xf32, #tpu.memory_space<vmem>>, vector<1x1x4x2xf32>
    %91 = vector.shape_cast %90 : vector<1x1x4x2xf32> to vector<4x2xf32>
    %cst_74 = arith.constant dense<0.000000e+00> : vector<4x256xf32>
    %92 = tpu.matmul %91, %89, %cst_74 {dimension_numbers = #tpu.dot_dimension_numbers<[1], [0], [0], [1], [0, 0, 1, 1], [], []>} : vector<4x2xf32>, vector<2x256xf32>, vector<4x256xf32> -> vector<4x256xf32>
    %93 = arith.addf %86, %92 : vector<4x256xf32>
    %c0_75 = arith.constant 0 : index
    %c0_76 = arith.constant 0 : index
    %94 = vector.load %arg5[%c0_75, %c0_76] : memref<4x1xf32, #tpu.memory_space<vmem>>, vector<4x1xf32>
    %95 = vector.broadcast %94 : vector<4x1xf32> to vector<4x256xf32>
    %96 = arith.addf %93, %95 : vector<4x256xf32>
    %97 = arith.negf %96 : vector<4x256xf32>
    %98 = math.exp %97 : vector<4x256xf32>
    %cst_77 = arith.constant 1.000000e+00 : f32
    %99 = vector.broadcast %cst_77 : f32 to vector<4x256xf32>
    %100 = arith.addf %99, %98 : vector<4x256xf32>
    %101 = arith.divf %99, %100 : vector<4x256xf32>
    %102 = arith.mulf %96, %101 : vector<4x256xf32>
    %103 = arith.addf %102, %1 : vector<4x256xf32>
    %c0_78 = arith.constant 0 : index
    %c0_79 = arith.constant 0 : index
    %c0_80 = arith.constant 0 : index
    %104 = vector.load %arg6[%c0_78, %c0_79, %c0_80] : memref<1x4x256xf32, #tpu.memory_space<vmem>>, vector<1x4x256xf32>
    %105 = vector.shape_cast %104 : vector<1x4x256xf32> to vector<4x256xf32>
    %106 = vector.shape_cast %103 : vector<4x256xf32> to vector<1x4x256xf32>
    tpu.vector_store %arg6[%c0_78, %c0_79, %c0_80], %106 {strides = array<i32>} : memref<1x4x256xf32, #tpu.memory_space<vmem>>, vector<1x4x256xf32>,
    return
  }
  func.func @transform_0(%arg0: i32) -> (i32, i32, i32) {
    %c0_i32 = arith.constant 0 : i32
    %c0_i32_0 = arith.constant 0 : i32
    %c0_i32_1 = arith.constant 0 : i32
    return %arg0, %c0_i32, %c0_i32_0 : i32, i32, i32
  }
  func.func @transform_1(%arg0: i32) -> (i32, i32) {
    %c0_i32 = arith.constant 0 : i32
    %c0_i32_0 = arith.constant 0 : i32
    %c0_i32_1 = arith.constant 0 : i32
    return %c0_i32, %c0_i32_0 : i32, i32
  }
  func.func @transform_2(%arg0: i32) -> (i32, i32) {
    %c0_i32 = arith.constant 0 : i32
    %c0_i32_0 = arith.constant 0 : i32
    %c0_i32_1 = arith.constant 0 : i32
    return %c0_i32, %c0_i32_0 : i32, i32
  }
  func.func @transform_3(%arg0: i32) -> (i32, i32, i32, i32) {
    %c0_i32 = arith.constant 0 : i32
    %c0_i32_0 = arith.constant 0 : i32
    %c0_i32_1 = arith.constant 0 : i32
    %c0_i32_2 = arith.constant 0 : i32
    %c0_i32_3 = arith.constant 0 : i32
    return %c0_i32, %c0_i32_0, %c0_i32_1, %c0_i32_2 : i32, i32, i32, i32
  }
  func.func @transform_4(%arg0: i32) -> (i32, i32) {
    %c0_i32 = arith.constant 0 : i32
    %c0_i32_0 = arith.constant 0 : i32
    %c0_i32_1 = arith.constant 0 : i32
    return %c0_i32, %c0_i32_0 : i32, i32
  }
  func.func @transform_5(%arg0: i32) -> (i32, i32, i32) {
    %c0_i32 = arith.constant 0 : i32
    %c0_i32_0 = arith.constant 0 : i32
    %c0_i32_1 = arith.constant 0 : i32
    return %arg0, %c0_i32, %c0_i32_0 : i32, i32, i32
  }
}

</mosaic_0001>

<llo_original>
// kernel: tpu_custom_call.1
$region0: #{tpu_custom_call.1}
  #allocation0 [shape = 'u32[]', space=smem, size = 0x4, offset = 0x4, fixed_abs, tag = 'smem constant byte address 0x4 - core index']
  #allocation1 [shape = 'u32[144,128]{1,0:T(1,128)}', space=vmem, size = 0x12000, scoped, tag = 'internal scratch']
  #allocation2 [shape = 'f32[2,512]{1,0:T(2,128)}', space=vmem, size = 0x1000, scoped, tag = 'scratch operand']
  %s0 = inlined_call_operand.vmem [shape: f32[2,4,256], index: 0, kind: input, shape index: {}]
  %s1 = inlined_call_operand.vmem [shape: f32[2,4], index: 1, kind: input, shape index: {}]
  %s2 = inlined_call_operand.vmem [shape: f32[2,1], index: 2, kind: input, shape index: {}]
  %s3 = inlined_call_operand.vmem [shape: f32[3,3,4,2], index: 3, kind: input, shape index: {}]
  %s4 = inlined_call_operand.vmem [shape: f32[4,1], index: 4, kind: input, shape index: {}]
  %s5 = inlined_call_operand.hbm [shape: f32[2,4,256], index: 5, kind: output, shape index: {}]
  %s6 = sld [smem:[#allocation0]]
  $region53: #{tpu_custom_call.1} parent=0
    _
  %s8 = ssub.s32 1, %s6
  %s9 = scalar_select 0, %s8, %s6
  $region1: #{tpu_custom_call.1} parent=0
    #allocation3 [shape = 'u8[8192]{0}', space=vmem, size = 0x2000, scoped, tag = 'output window, operand 0']
    #allocation4 [shape = 's32[2]{0}', space=sflag, size = 0x8, scoped, tag = 'scoped memory for tpu_custom_call.1']
    %10 = vsyncpa [#allocation4], 0
    %s11 = scalar_lea.sflag [#allocation4], 1
    %12 = vsyncpa %s11, 0
    loop: start=0, step=1, limit=4
    $region2: #{tpu_custom_call.1} parent=1 // loop_pre_header
      _
    $region3: #{tpu_custom_call.1} parent=1 // loop_header
      %s14 = sphi 0, %s18
      %p15 = scmp.ge.s32.totalorder %s14, 4
      %s24 = sphi 0, %s26
      %s27 = sphi 0, %s24
      %s28 = sphi 0, %s27
      %s44 = sphi 0, %s28
      %s48 = sphi 0, %s48
      %s50 = sphi 0, %s48
      %s51 = sphi 0, %s50
      %s65 = sphi 0, %s51
      %s69 = sphi 0, %s69
      %s71 = sphi 0, %s69
      %s72 = sphi 0, %s71
      %s86 = sphi 0, %s72
      %s90 = sphi 0, %s90
      %s92 = sphi 0, %s90
      %s93 = sphi 0, %s92
      %s107 = sphi 0, %s93
      %s111 = sphi 0, %s111
      %s113 = sphi 0, %s111
      %s114 = sphi 0, %s113
      %s128 = sphi 0, %s114
      %s134 = sphi 0, %s136
      %s137 = sphi 0, %s134
      %s138 = sphi 0, %s137
      %s154 = sphi 0, %s138
    $region4: #{tpu_custom_call.1} parent=1 // loop_header_branch
      %17 = sbr.rel (%p15) target = $region8
    $region5: #{tpu_custom_call.1} parent=1 // loop_body
      %s19 = ssub.s32 %s14, 1
      %s20 = ssub.s32 %s14, 2
      %s21 = sadd.s32 %s14, 1
      %s22 = ssub.s32 %s14, %s21
      %p23 = scmp.eq.s32.totalorder %s22, 0
      %s25 = sadd.s32 %s24, 1
      %s26 = scalar_select %p23, %s24, %s25
      %p29 = pneg %p23
      %p30 = scmp.eq.s32.totalorder %s14, 1
      %p31 = por %p29, %p30
      %p32 = scmp.ne.s32.totalorder %s24, %s27
      %p33 = scmp.eq.s32.totalorder %s14, 0
      %p34 = por %p32, %p33
      %p35 = scmp.ne.s32.totalorder %s24, %s27
      %p36 = scmp.eq.s32.totalorder %s19, 1
      %p37 = por %p35, %p36
      %p38 = scmp.ne.s32.totalorder %s27, %s28
      %p39 = scmp.eq.s32.totalorder %s19, 0
      %p40 = por %p38, %p39
      %p41 = scmp.ne.s32.totalorder %s27, %s28
      %p42 = scmp.eq.s32.totalorder %s20, 1
      %p43 = por %p41, %p42
      %p45 = scmp.ne.s32.totalorder %s28, %s44
      %p46 = scmp.eq.s32.totalorder %s20, 0
      %p47 = por %p45, %p46
      %s49 = sadd.s32 %s48, 1
      %p52 = scmp.eq.s32.totalorder %s14, 1
      %p53 = scmp.ne.s32.totalorder %s48, %s50
      %p54 = scmp.eq.s32.totalorder %s14, 0
      %p55 = por %p53, %p54
      %p56 = scmp.ne.s32.totalorder %s48, %s50
      %p57 = scmp.eq.s32.totalorder %s19, 1
      %p58 = por %p56, %p57
      %p59 = scmp.ne.s32.totalorder %s50, %s51
      %p60 = scmp.eq.s32.totalorder %s19, 0
      %p61 = por %p59, %p60
      %p62 = scmp.ne.s32.totalorder %s50, %s51
      %p63 = scmp.eq.s32.totalorder %s20, 1
      %p64 = por %p62, %p63
      %p66 = scmp.ne.s32.totalorder %s51, %s65
      %p67 = scmp.eq.s32.totalorder %s20, 0
      %p68 = por %p66, %p67
      %s70 = sadd.s32 %s69, 1
      %p73 = scmp.eq.s32.totalorder %s14, 1
      %p74 = scmp.ne.s32.totalorder %s69, %s71
      %p75 = scmp.eq.s32.totalorder %s14, 0
      %p76 = por %p74, %p75
      %p77 = scmp.ne.s32.totalorder %s69, %s71
      %p78 = scmp.eq.s32.totalorder %s19, 1
      %p79 = por %p77, %p78
      %p80 = scmp.ne.s32.totalorder %s71, %s72
      %p81 = scmp.eq.s32.totalorder %s19, 0
      %p82 = por %p80, %p81
      %p83 = scmp.ne.s32.totalorder %s71, %s72
      %p84 = scmp.eq.s32.totalorder %s20, 1
      %p85 = por %p83, %p84
      %p87 = scmp.ne.s32.totalorder %s72, %s86
      %p88 = scmp.eq.s32.totalorder %s20, 0
      %p89 = por %p87, %p88
      %s91 = sadd.s32 %s90, 1
      %p94 = scmp.eq.s32.totalorder %s14, 1
      %p95 = scmp.ne.s32.totalorder %s90, %s92
      %p96 = scmp.eq.s32.totalorder %s14, 0
      %p97 = por %p95, %p96
      %p98 = scmp.ne.s32.totalorder %s90, %s92
      %p99 = scmp.eq.s32.totalorder %s19, 1
      %p100 = por %p98, %p99
      %p101 = scmp.ne.s32.totalorder %s92, %s93
      %p102 = scmp.eq.s32.totalorder %s19, 0
      %p103 = por %p101, %p102
      %p104 = scmp.ne.s32.totalorder %s92, %s93
      %p105 = scmp.eq.s32.totalorder %s20, 1
      %p106 = por %p104, %p105
      %p108 = scmp.ne.s32.totalorder %s93, %s107
      %p109 = scmp.eq.s32.totalorder %s20, 0
      %p110 = por %p108, %p109
      %s112 = sadd.s32 %s111, 1
      %p115 = scmp.eq.s32.totalorder %s14, 1
      %p116 = scmp.ne.s32.totalorder %s111, %s113
      %p117 = scmp.eq.s32.totalorder %s14, 0
      %p118 = por %p116, %p117
      %p119 = scmp.ne.s32.totalorder %s111, %s113
      %p120 = scmp.eq.s32.totalorder %s19, 1
      %p121 = por %p119, %p120
      %p122 = scmp.ne.s32.totalorder %s113, %s114
      %p123 = scmp.eq.s32.totalorder %s19, 0
      %p124 = por %p122, %p123
      %p125 = scmp.ne.s32.totalorder %s113, %s114
      %p126 = scmp.eq.s32.totalorder %s20, 1
      %p127 = por %p125, %p126
      %p129 = scmp.ne.s32.totalorder %s114, %s128
      %p130 = scmp.eq.s32.totalorder %s20, 0
      %p131 = por %p129, %p130
      %s132 = ssub.s32 %s14, %s21
      %p133 = scmp.eq.s32.totalorder %s132, 0
      %s135 = sadd.s32 %s134, 1
      %s136 = scalar_select %p133, %s134, %s135
      %p139 = pneg %p133
      %p140 = scmp.eq.s32.totalorder %s14, 1
      %p141 = por %p139, %p140
      %p142 = scmp.ne.s32.totalorder %s134, %s137
      %p143 = scmp.eq.s32.totalorder %s14, 0
      %p144 = por %p142, %p143
      %p145 = scmp.ne.s32.totalorder %s134, %s137
      %p146 = scmp.eq.s32.totalorder %s19, 1
      %p147 = por %p145, %p146
      %p148 = scmp.ne.s32.totalorder %s137, %s138
      %p149 = scmp.eq.s32.totalorder %s19, 0
      %p150 = por %p148, %p149
      %p151 = scmp.ne.s32.totalorder %s137, %s138
      %p152 = scmp.eq.s32.totalorder %s20, 1
      %p153 = por %p151, %p152
      %p155 = scmp.ne.s32.totalorder %s138, %s154
      %p156 = scmp.eq.s32.totalorder %s20, 0
      %p157 = por %p155, %p156
      %p158 = scmp.le.s32.totalorder 1, %s14
      %p159 = scmp.lt.s32.totalorder %s14, 3
      %p160 = pnand %p158, %p159
      %p161 = pneg %p160
      // Predicated region
      $region9: #{tpu_custom_call.1} parent=5 // pred_check
        _
      $region10: #{tpu_custom_call.1} parent=5 // pred_check_branch
        %163 = sbr.rel (%p160) target = $region12
      $region11: #{tpu_custom_call.1} parent=5 // pred_region
        %s164 = ssub.s32 %s14, 1
        // Predicated region
        $region13: #{tpu_custom_call.1} parent=11 // pred_check
          %p165 = pneg %p61
        $region14: #{tpu_custom_call.1} parent=11 // pred_check_branch
          %167 = sbr.rel (%p165) target = $region16
        $region15: #{tpu_custom_call.1} parent=11 // pred_region
          _
        $region16: #{tpu_custom_call.1} parent=11 // pred_fallthru
          _
        // Predicated region
        $region17: #{tpu_custom_call.1} parent=11 // pred_check
          %p168 = pneg %p82
        $region18: #{tpu_custom_call.1} parent=11 // pred_check_branch
          %170 = sbr.rel (%p168) target = $region20
        $region19: #{tpu_custom_call.1} parent=11 // pred_region
          _
        $region20: #{tpu_custom_call.1} parent=11 // pred_fallthru
          _
        // Predicated region
        $region21: #{tpu_custom_call.1} parent=11 // pred_check
          %p171 = pneg %p103
        $region22: #{tpu_custom_call.1} parent=11 // pred_check_branch
          %173 = sbr.rel (%p171) target = $region24
        $region23: #{tpu_custom_call.1} parent=11 // pred_region
          _
        $region24: #{tpu_custom_call.1} parent=11 // pred_fallthru
          _
        // Predicated region
        $region25: #{tpu_custom_call.1} parent=11 // pred_check
          %p174 = pneg %p124
        $region26: #{tpu_custom_call.1} parent=11 // pred_check_branch
          %176 = sbr.rel (%p174) target = $region28
        $region27: #{tpu_custom_call.1} parent=11 // pred_region
          _
        $region28: #{tpu_custom_call.1} parent=11 // pred_fallthru
          _
      $region12: #{tpu_custom_call.1} parent=5 // pred_fallthru
        _
      %p177 = scmp.lt.s32.totalorder %s14, 2
      // Predicated region
      $region29: #{tpu_custom_call.1} parent=5 // pred_check
        %p178 = pneg %p177
      $region30: #{tpu_custom_call.1} parent=5 // pred_check_branch
        %180 = sbr.rel (%p178) target = $region32
      $region31: #{tpu_custom_call.1} parent=5 // pred_region
        // Predicated region
        $region33: #{tpu_custom_call.1} parent=31 // pred_check
          %p181 = pneg %p34
        $region34: #{tpu_custom_call.1} parent=31 // pred_check_branch
          %183 = sbr.rel (%p181) target = $region36
        $region35: #{tpu_custom_call.1} parent=31 // pred_region
          %p184 = scmp.lt.s32.totalorder %s14, 1
          %s185 = scalar_select %p184, %s14, 1
          %s186 = smul.addr %s185, 2
          %s187 = smul.addr %s186, 4
          %s188 = scalar_lea.vmem %s0, %s187
        $region36: #{tpu_custom_call.1} parent=31 // pred_fallthru
          _
      $region32: #{tpu_custom_call.1} parent=5 // pred_fallthru
        _
      %p189 = scmp.le.s32.totalorder 1, %s14
      %p190 = scmp.lt.s32.totalorder %s14, 3
      %p191 = pnand %p189, %p190
      %p192 = pneg %p191
      // Predicated region
      $region37: #{tpu_custom_call.1} parent=5 // pred_check
        _
      $region38: #{tpu_custom_call.1} parent=5 // pred_check_branch
        %194 = sbr.rel (%p191) target = $region40
      $region39: #{tpu_custom_call.1} parent=5 // pred_region
        %s195 = ssub.s32 %s14, 1
        %p196 = scmp.lt.s32.totalorder %s19, 1
        %s197 = scalar_select %p196, %s19, 1
        %s198 = smul.addr %s197, 2
        %s199 = smul.addr %s198, 4
        %s200 = scalar_lea.vmem %s0, %s199
        %p201 = pneg %p40
        %p202 = pneg %p37
        %p203 = pneg %p61
        %p204 = pneg %p58
        %p205 = pneg %p82
        %p206 = pneg %p79
        %p207 = pneg %p103
        %p208 = pneg %p100
        %p209 = pneg %p124
        %p210 = pneg %p121
        %p211 = pneg %p150
        %p212 = pneg %p147
        %s213 = sand.u32 %s137, 1
        %s214 = scalar_lea.sflag [#allocation4], %s213
        %s215 = sand.u32 %s137, 1
        %s216 = smul.addr %s215, 8
        %s217 = scalar_lea.vmem [#allocation3], %s216
        %p218 = scmp.lt.s32.totalorder %s19, 1
        %s219 = scalar_select %p218, %s19, 1
        %s220 = smul.addr %s219, 2
        %s221 = smul.addr %s220, 4
        %s222 = scalar_lea.vmem %s0, %s221
        %v223 = vld [vmem:[%s222] sm:$0xff]
        %v224 = vld [vmem:[%s1] sm:$0x3]
        %v225 = vld [vmem:[%s2] sm:$0x3]
        %227 = vset.pattern.permute.xlu0 0
        %228 = vperm.xlu0 %227, %v225
        %v229 = vpop.permute.xlu0 %228
        %v232 = vcombine.high %v223, %v223
        %vm233 = vcmask 31744
        %v235 = vsel %vm233, %v224, 0
        %vm237 = vcmask 1043456
        %v238 = vsel %vm237, %v223, 0
        %v240 = vsel %vm237, %v232, 0
        %242 = vmatprep.subr.mxu0 %v240
        %243 = vmatpush1.msra.mxu0 %v238
        %244 = vmatprep.subr.mxu0 0.0
        %245 = vmatpush1.msra.mxu0 0.0
        %246 = vmatprep.subr.mxu0 0.0
        %247 = vmatpush1.msra.mxu0 0.0
        %248 = vmatprep.subr.mxu0 0.0
        %249 = vmatpush1.msra.mxu0 0.0
        %250 = vmatprep.subr.mxu0 0.0
        %251 = vmatpush1.msra.mxu0 0.0
        %252 = vmatprep.subr.mxu0 0.0
        %253 = vmatpush1.msra.mxu0 0.0
        %254 = vmatprep.subr.mxu0 0.0
        %255 = vmatpush1.msra.mxu0 0.0
        %256 = vmatprep.subr.mxu0 0.0
        %257 = vmatpush1.msra.mxu0 0.0
        %258 = vmatprep.subr.mxu0 0.0
        %259 = vmatpush1.msra.mxu0 0.0
        %260 = vmatprep.subr.mxu0 0.0
        %261 = vmatpush1.msra.mxu0 0.0
        %262 = vmatprep.subr.mxu0 0.0
        %263 = vmatpush1.msra.mxu0 0.0
        %264 = vmatprep.subr.mxu0 0.0
        %265 = vmatpush1.msra.mxu0 0.0
        %266 = vmatprep.subr.mxu0 0.0
        %267 = vmatpush1.msra.mxu0 0.0
        %268 = vmatprep.subr.mxu0 0.0
        %269 = vmatpush1.msra.mxu0 0.0
        %270 = vmatprep.subr.mxu0 0.0
        %271 = vmatpush1.msra.mxu0 0.0
        %272 = vmatprep.subr.mxu0 0.0
        %273 = vmatpush1.msra.mxu0 0.0
        %274 = vmatprep.subr.mxu0 0.0
        %275 = vmatpush1.msra.mxu0 0.0
        %276 = vmatprep.subr.mxu0 0.0
        %277 = vmatpush1.msra.mxu0 0.0
        %278 = vmatprep.subr.mxu0 0.0
        %279 = vmatpush1.msra.mxu0 0.0
        %280 = vmatprep.subr.mxu0 0.0
        %281 = vmatpush1.msra.mxu0 0.0
        %282 = vmatprep.subr.mxu0 0.0
        %283 = vmatpush1.msra.mxu0 0.0
        %284 = vmatprep.subr.mxu0 0.0
        %285 = vmatpush1.msra.mxu0 0.0
        %286 = vmatprep.subr.mxu0 0.0
        %287 = vmatpush1.msra.mxu0 0.0
        %288 = vmatprep.subr.mxu0 0.0
        %289 = vmatpush1.msra.mxu0 0.0
        %290 = vmatprep.subr.mxu0 0.0
        %291 = vmatpush1.msra.mxu0 0.0
        %292 = vmatprep.subr.mxu0 0.0
        %293 = vmatpush1.msra.mxu0 0.0
        %294 = vmatprep.subr.mxu0 0.0
        %295 = vmatpush1.msra.mxu0 0.0
        %296 = vmatprep.subr.mxu0 0.0
        %297 = vmatpush1.msra.mxu0 0.0
        %298 = vmatprep.subr.mxu0 0.0
        %299 = vmatpush1.msra.mxu0 0.0
        %300 = vmatprep.subr.mxu0 0.0
        %301 = vmatpush1.msra.mxu0 0.0
        %302 = vmatprep.subr.mxu0 0.0
        %303 = vmatpush1.msra.mxu0 0.0
        %304 = vmatprep.subr.mxu0 0.0
        %305 = vmatpush1.msra.mxu0 0.0
        %306 = vmatprep.mubr.f32.mxu0 0.0
        %307 = vmatmul.mubr.f32.gmra.mrb[0].mxu0 %v235
        %v308 = vpop.f32.mrb[0].mxu0
        %v309 = vadd.f32 %v229, %v308
        %v310 = vpop.f32.mrb[0].mxu0
        %v311 = vadd.f32 %v229, %v310
        %312 = vdwg.mxu0
        %v313 = vxor.u32 %v309, 2147483648
        %v314 = vxor.u32 %v311, 2147483648
        %v315 = vmul.f32 %v313, 1.442695
        %v316 = vpow.pop %v315
        %v317 = vmul.f32 %v314, 1.442695
        %v318 = vpow.pop %v317
        %v319 = vadd.f32 %v316, 1.0
        %v320 = vadd.f32 %v318, 1.0
        %v321 = vrcp.pop %v319
        %v322 = vmul.f32 1.0, %v321
        %v323 = vrcp.pop %v320
        %v324 = vmul.f32 1.0, %v323
        %v325 = vmul.f32 %v309, %v322
        %v326 = vmul.f32 %v311, %v324
        %327 = vst [vmem:[#allocation2] sm:$0x3] 0.0
        %328 = vst [vmem:[#allocation2 + $0x6] sm:$0x3] 0.0
        %v331 = vcombine.low %v325, %v326
        %v333 = vunpack.c.l.s4 1983009808
        %v334 = vunpack.c.0.s8 %v333
        %v335 = vlaneseq
        %v336 = vshrl.u32 %v335, 7
        %v337 = vsub.s32 %v334, %v336
        %v338 = vrot.slane %v331, %v337
        %340 = vst [vmem:[#allocation2 + $0x2] sm:$0xf] %v338
        %v341 = vlaneseq
        %v342 = vand.u32 %v341, 127
        %v343 = vadd.s32 %v342, 128
        %vm344 = vcmp.lt.s32.totalorder %v342, 0
        %v345 = vsub.s32 0, %v342
        %v346 = vsel %vm344, %v345, %v342
        %v347 = vshrl.u32 %v346, 4
        %v348 = vand.u32 %v346, 15
        %v349 = vsub.s32 0, %v348
        %v350 = vsel %vm344, %v349, %v348
        %vm351 = vcmp.lt.s32.totalorder %v343, 0
        %v352 = vsub.s32 0, %v343
        %v353 = vsel %vm351, %v352, %v343
        %v354 = vshrl.u32 %v353, 4
        %v355 = vand.u32 %v353, 15
        %v356 = vsub.s32 0, %v355
        %v357 = vsel %vm351, %v356, %v355
        %vm358 = vcmp.ne.s32.totalorder %v350, 0
        %vm359 = vcmp.ne.s32.totalorder %v357, 0
        %vm360 = vcmp.lt.s32.totalorder %v350, 0
        %vm361 = vcmp.lt.s32.totalorder %v357, 0
        %vm362 = vmand %vm360, %vm358
        %vm363 = vmand %vm361, %vm359
        %v364 = vadd.s32 %v350, 16
        %v365 = vadd.s32 %v357, 16
        %v366 = vsel %vm362, %v364, %v350
        %v367 = vsel %vm363, %v365, %v357
        %vm368 = vcmp.ge.s32.totalorder %v366, 1
        %vm369 = vcmp.ge.s32.totalorder %v367, 1
        %vm370 = vcmp.le.s32.totalorder %v366, 14
        %vm371 = vcmp.le.s32.totalorder %v367, 14
        %v372 = vld [vmem:[#allocation2] sm:$0x3f]
        %v374 = vcombine.high %v372, %v372
        %v376 = vunpack.c.l.s4 1983009808
        %v377 = vunpack.c.0.s8 %v376
        %v378 = vlaneseq
        %v379 = vshrl.u32 %v378, 7
        %v380 = vsub.s32 %v377, %v379
        %v381 = vrot.slane %v372, %v380
        %v383 = vunpack.c.l.s4 1983009808
        %v384 = vunpack.c.0.s8 %v383
        %v385 = vlaneseq
        %v386 = vshrl.u32 %v385, 7
        %v387 = vsub.s32 %v384, %v386
        %v388 = vrot.slane %v374, %v387
        %v389 = vcombine.high %v381, %v381
        %390 = vrot.lane.b32.xlu0 %v381, 17
        %v391 = vpop.permute.xlu0 %390
        %392 = vrot.lane.b32.xlu0 %v389, 17
        %v393 = vpop.permute.xlu0 %392
        %394 = vrot.lane.b32.xlu0 %v388, 17
        %v395 = vpop.permute.xlu0 %394
        %vm396 = vcmask 138240
        %v397 = vsel %vm396, %v391, %v393
        %v398 = vsel %vm396, %v393, %v395
        %v401 = vsel %vm368, %v397, 0.0
        %v402 = vsel %vm369, %v398, 0.0
        %v403 = vld [vmem:[%s3] sm:$0xf]
        %s404 = scalar_lea.vmem %s3, 4
        %v405 = vld [vmem:[%s404] sm:$0xf]
        %406 = vrot.lane.b32.xlu0 %v381, 16
        %v407 = vpop.permute.xlu0 %406
        %408 = vrot.lane.b32.xlu0 %v389, 16
        %v409 = vpop.permute.xlu0 %408
        %410 = vrot.lane.b32.xlu0 %v388, 16
        %v411 = vpop.permute.xlu0 %410
        %vm412 = vcmask 130048
        %v413 = vsel %vm412, %v407, %v409
        %v414 = vsel %vm412, %v409, %v411
        %vm415 = vcmask 15360
        %v417 = vsel %vm415, %v405, 0
        %vm419 = vcmask 1041408
        %v420 = vsel %vm419, %v413, 0
        %v422 = vsel %vm419, %v414, 0
        %424 = vmatprep.subr.mxu0 %v422
        %425 = vmatpush1.msra.mxu0 %v420
        %426 = vmatprep.subr.mxu0 0.0
        %427 = vmatpush1.msra.mxu0 0.0
        %428 = vmatprep.subr.mxu0 0.0
        %429 = vmatpush1.msra.mxu0 0.0
        %430 = vmatprep.subr.mxu0 0.0
        %431 = vmatpush1.msra.mxu0 0.0
        %432 = vmatprep.subr.mxu0 0.0
        %433 = vmatpush1.msra.mxu0 0.0
        %434 = vmatprep.subr.mxu0 0.0
        %435 = vmatpush1.msra.mxu0 0.0
        %436 = vmatprep.subr.mxu0 0.0
        %437 = vmatpush1.msra.mxu0 0.0
        %438 = vmatprep.subr.mxu0 0.0
        %439 = vmatpush1.msra.mxu0 0.0
        %440 = vmatprep.subr.mxu0 0.0
        %441 = vmatpush1.msra.mxu0 0.0
        %442 = vmatprep.subr.mxu0 0.0
        %443 = vmatpush1.msra.mxu0 0.0
        %444 = vmatprep.subr.mxu0 0.0
        %445 = vmatpush1.msra.mxu0 0.0
        %446 = vmatprep.subr.mxu0 0.0
        %447 = vmatpush1.msra.mxu0 0.0
        %448 = vmatprep.subr.mxu0 0.0
        %449 = vmatpush1.msra.mxu0 0.0
        %450 = vmatprep.subr.mxu0 0.0
        %451 = vmatpush1.msra.mxu0 0.0
        %452 = vmatprep.subr.mxu0 0.0
        %453 = vmatpush1.msra.mxu0 0.0
        %454 = vmatprep.subr.mxu0 0.0
        %455 = vmatpush1.msra.mxu0 0.0
        %456 = vmatprep.subr.mxu0 0.0
        %457 = vmatpush1.msra.mxu0 0.0
        %458 = vmatprep.subr.mxu0 0.0
        %459 = vmatpush1.msra.mxu0 0.0
        %460 = vmatprep.subr.mxu0 0.0
        %461 = vmatpush1.msra.mxu0 0.0
        %462 = vmatprep.subr.mxu0 0.0
        %463 = vmatpush1.msra.mxu0 0.0
        %464 = vmatprep.subr.mxu0 0.0
        %465 = vmatpush1.msra.mxu0 0.0
        %466 = vmatprep.subr.mxu0 0.0
        %467 = vmatpush1.msra.mxu0 0.0
        %468 = vmatprep.subr.mxu0 0.0
        %469 = vmatpush1.msra.mxu0 0.0
        %470 = vmatprep.subr.mxu0 0.0
        %471 = vmatpush1.msra.mxu0 0.0
        %472 = vmatprep.subr.mxu0 0.0
        %473 = vmatpush1.msra.mxu0 0.0
        %474 = vmatprep.subr.mxu0 0.0
        %475 = vmatpush1.msra.mxu0 0.0
        %476 = vmatprep.subr.mxu0 0.0
        %477 = vmatpush1.msra.mxu0 0.0
        %478 = vmatprep.subr.mxu0 0.0
        %479 = vmatpush1.msra.mxu0 0.0
        %480 = vmatprep.subr.mxu0 0.0
        %481 = vmatpush1.msra.mxu0 0.0
        %482 = vmatprep.subr.mxu0 0.0
        %483 = vmatpush1.msra.mxu0 0.0
        %484 = vmatprep.subr.mxu0 0.0
        %485 = vmatpush1.msra.mxu0 0.0
        %486 = vmatprep.subr.mxu0 0.0
        %487 = vmatpush1.msra.mxu0 0.0
        %488 = vmatprep.mubr.f32.mxu0 0.0
        %489 = vmatmul.mubr.f32.gmra.mrb[0].mxu0 %v417
        %v490 = vpop.f32.mrb[0].mxu0
        %v491 = vadd.f32 0.0, %v490
        %v492 = vpop.f32.mrb[0].mxu0
        %v493 = vadd.f32 0.0, %v492
        %494 = vdwg.mxu0
        %v496 = vsel %vm415, %v403, 0
        %v499 = vsel %vm419, %v401, 0
        %v502 = vsel %vm419, %v402, 0
        %504 = vmatprep.subr.mxu0 %v502
        %505 = vmatpush1.msra.mxu0 %v499
        %506 = vmatprep.subr.mxu0 0.0
        %507 = vmatpush1.msra.mxu0 0.0
        %508 = vmatprep.subr.mxu0 0.0
        %509 = vmatpush1.msra.mxu0 0.0
        %510 = vmatprep.subr.mxu0 0.0
        %511 = vmatpush1.msra.mxu0 0.0
        %512 = vmatprep.subr.mxu0 0.0
        %513 = vmatpush1.msra.mxu0 0.0
        %514 = vmatprep.subr.mxu0 0.0
        %515 = vmatpush1.msra.mxu0 0.0
        %516 = vmatprep.subr.mxu0 0.0
        %517 = vmatpush1.msra.mxu0 0.0
        %518 = vmatprep.subr.mxu0 0.0
        %519 = vmatpush1.msra.mxu0 0.0
        %520 = vmatprep.subr.mxu0 0.0
        %521 = vmatpush1.msra.mxu0 0.0
        %522 = vmatprep.subr.mxu0 0.0
        %523 = vmatpush1.msra.mxu0 0.0
        %524 = vmatprep.subr.mxu0 0.0
        %525 = vmatpush1.msra.mxu0 0.0
        %526 = vmatprep.subr.mxu0 0.0
        %527 = vmatpush1.msra.mxu0 0.0
        %528 = vmatprep.subr.mxu0 0.0
        %529 = vmatpush1.msra.mxu0 0.0
        %530 = vmatprep.subr.mxu0 0.0
        %531 = vmatpush1.msra.mxu0 0.0
        %532 = vmatprep.subr.mxu0 0.0
        %533 = vmatpush1.msra.mxu0 0.0
        %534 = vmatprep.subr.mxu0 0.0
        %535 = vmatpush1.msra.mxu0 0.0
        %536 = vmatprep.subr.mxu0 0.0
        %537 = vmatpush1.msra.mxu0 0.0
        %538 = vmatprep.subr.mxu0 0.0
        %539 = vmatpush1.msra.mxu0 0.0
        %540 = vmatprep.subr.mxu0 0.0
        %541 = vmatpush1.msra.mxu0 0.0
        %542 = vmatprep.subr.mxu0 0.0
        %543 = vmatpush1.msra.mxu0 0.0
        %544 = vmatprep.subr.mxu0 0.0
        %545 = vmatpush1.msra.mxu0 0.0
        %546 = vmatprep.subr.mxu0 0.0
        %547 = vmatpush1.msra.mxu0 0.0
        %548 = vmatprep.subr.mxu0 0.0
        %549 = vmatpush1.msra.mxu0 0.0
        %550 = vmatprep.subr.mxu0 0.0
        %551 = vmatpush1.msra.mxu0 0.0
        %552 = vmatprep.subr.mxu0 0.0
        %553 = vmatpush1.msra.mxu0 0.0
        %554 = vmatprep.subr.mxu0 0.0
        %555 = vmatpush1.msra.mxu0 0.0
        %556 = vmatprep.subr.mxu0 0.0
        %557 = vmatpush1.msra.mxu0 0.0
        %558 = vmatprep.subr.mxu0 0.0
        %559 = vmatpush1.msra.mxu0 0.0
        %560 = vmatprep.subr.mxu0 0.0
        %561 = vmatpush1.msra.mxu0 0.0
        %562 = vmatprep.subr.mxu0 0.0
        %563 = vmatpush1.msra.mxu0 0.0
        %564 = vmatprep.subr.mxu0 0.0
        %565 = vmatpush1.msra.mxu0 0.0
        %566 = vmatprep.subr.mxu0 0.0
        %567 = vmatpush1.msra.mxu0 0.0
        %568 = vmatprep.mubr.f32.mxu0 0.0
        %569 = vmatmul.mubr.f32.gmra.mrb[0].mxu0 %v496
        %v570 = vpop.f32.mrb[0].mxu0
        %v571 = vadd.f32 %v491, %v570
        %v572 = vpop.f32.mrb[0].mxu0
        %v573 = vadd.f32 %v493, %v572
        %574 = vdwg.mxu0
        %v575 = vld [vmem:[#allocation2] sm:$0x3f]
        %v577 = vcombine.high %v575, %v575
        %v579 = vunpack.c.l.s4 1983009808
        %v580 = vunpack.c.0.s8 %v579
        %v581 = vlaneseq
        %v582 = vshrl.u32 %v581, 7
        %v583 = vsub.s32 %v580, %v582
        %v584 = vrot.slane %v575, %v583
        %v586 = vunpack.c.l.s4 1983009808
        %v587 = vunpack.c.0.s8 %v586
        %v588 = vlaneseq
        %v589 = vshrl.u32 %v588, 7
        %v590 = vsub.s32 %v587, %v589
        %v591 = vrot.slane %v577, %v590
        %v592 = vcombine.high %v584, %v584
        %593 = vrot.lane.b32.xlu0 %v584, 15
        %v594 = vpop.permute.xlu0 %593
        %595 = vrot.lane.b32.xlu0 %v592, 15
        %v596 = vpop.permute.xlu0 %595
        %597 = vrot.lane.b32.xlu0 %v591, 15
        %v598 = vpop.permute.xlu0 %597
        %vm599 = vcmask 121856
        %v600 = vsel %vm599, %v594, %v596
        %v601 = vsel %vm599, %v596, %v598
        %v604 = vsel %vm370, %v600, 0.0
        %v605 = vsel %vm371, %v601, 0.0
        %s606 = scalar_lea.vmem %s3, 8
        %v607 = vld [vmem:[%s606] sm:$0xf]
        %v609 = vsel %vm415, %v607, 0
        %v612 = vsel %vm419, %v604, 0
        %v615 = vsel %vm419, %v605, 0
        %617 = vmatprep.subr.mxu0 %v615
        %618 = vmatpush1.msra.mxu0 %v612
        %619 = vmatprep.subr.mxu0 0.0
        %620 = vmatpush1.msra.mxu0 0.0
        %621 = vmatprep.subr.mxu0 0.0
        %622 = vmatpush1.msra.mxu0 0.0
        %623 = vmatprep.subr.mxu0 0.0
        %624 = vmatpush1.msra.mxu0 0.0
        %625 = vmatprep.subr.mxu0 0.0
        %626 = vmatpush1.msra.mxu0 0.0
        %627 = vmatprep.subr.mxu0 0.0
        %628 = vmatpush1.msra.mxu0 0.0
        %629 = vmatprep.subr.mxu0 0.0
        %630 = vmatpush1.msra.mxu0 0.0
        %631 = vmatprep.subr.mxu0 0.0
        %632 = vmatpush1.msra.mxu0 0.0
        %633 = vmatprep.subr.mxu0 0.0
        %634 = vmatpush1.msra.mxu0 0.0
        %635 = vmatprep.subr.mxu0 0.0
        %636 = vmatpush1.msra.mxu0 0.0
        %637 = vmatprep.subr.mxu0 0.0
        %638 = vmatpush1.msra.mxu0 0.0
        %639 = vmatprep.subr.mxu0 0.0
        %640 = vmatpush1.msra.mxu0 0.0
        %641 = vmatprep.subr.mxu0 0.0
        %642 = vmatpush1.msra.mxu0 0.0
        %643 = vmatprep.subr.mxu0 0.0
        %644 = vmatpush1.msra.mxu0 0.0
        %645 = vmatprep.subr.mxu0 0.0
        %646 = vmatpush1.msra.mxu0 0.0
        %647 = vmatprep.subr.mxu0 0.0
        %648 = vmatpush1.msra.mxu0 0.0
        %649 = vmatprep.subr.mxu0 0.0
        %650 = vmatpush1.msra.mxu0 0.0
        %651 = vmatprep.subr.mxu0 0.0
        %652 = vmatpush1.msra.mxu0 0.0
        %653 = vmatprep.subr.mxu0 0.0
        %654 = vmatpush1.msra.mxu0 0.0
        %655 = vmatprep.subr.mxu0 0.0
        %656 = vmatpush1.msra.mxu0 0.0
        %657 = vmatprep.subr.mxu0 0.0
        %658 = vmatpush1.msra.mxu0 0.0
        %659 = vmatprep.subr.mxu0 0.0
        %660 = vmatpush1.msra.mxu0 0.0
        %661 = vmatprep.subr.mxu0 0.0
        %662 = vmatpush1.msra.mxu0 0.0
        %663 = vmatprep.subr.mxu0 0.0
        %664 = vmatpush1.msra.mxu0 0.0
        %665 = vmatprep.subr.mxu0 0.0
        %666 = vmatpush1.msra.mxu0 0.0
        %667 = vmatprep.subr.mxu0 0.0
        %668 = vmatpush1.msra.mxu0 0.0
        %669 = vmatprep.subr.mxu0 0.0
        %670 = vmatpush1.msra.mxu0 0.0
        %671 = vmatprep.subr.mxu0 0.0
        %672 = vmatpush1.msra.mxu0 0.0
        %673 = vmatprep.subr.mxu0 0.0
        %674 = vmatpush1.msra.mxu0 0.0
        %675 = vmatprep.subr.mxu0 0.0
        %676 = vmatpush1.msra.mxu0 0.0
        %677 = vmatprep.subr.mxu0 0.0
        %678 = vmatpush1.msra.mxu0 0.0
        %679 = vmatprep.subr.mxu0 0.0
        %680 = vmatpush1.msra.mxu0 0.0
        %681 = vmatprep.mubr.f32.mxu0 0.0
        %682 = vmatmul.mubr.f32.gmra.mrb[0].mxu0 %v609
        %v683 = vpop.f32.mrb[0].mxu0
        %v684 = vadd.f32 0.0, %v683
        %v685 = vpop.f32.mrb[0].mxu0
        %v686 = vadd.f32 0.0, %v685
        %687 = vdwg.mxu0
        %v688 = vadd.f32 %v571, %v684
        %v689 = vadd.f32 %v573, %v686
        %v690 = vld [vmem:[#allocation2] sm:$0x3f]
        %v692 = vcombine.high %v690, %v690
        %v694 = vunpack.c.l.s4 1983009808
        %v695 = vunpack.c.0.s8 %v694
        %v696 = vlaneseq
        %v697 = vshrl.u32 %v696, 7
        %v698 = vsub.s32 %v695, %v697
        %v699 = vrot.slane %v690, %v698
        %v701 = vunpack.c.l.s4 1983009808
        %v702 = vunpack.c.0.s8 %v701
        %v703 = vlaneseq
        %v704 = vshrl.u32 %v703, 7
        %v705 = vsub.s32 %v702, %v704
        %v706 = vrot.slane %v692, %v705
        %v707 = vcombine.high %v699, %v699
        %708 = vrot.lane.b32.xlu0 %v699, 1
        %v709 = vpop.permute.xlu0 %708
        %710 = vrot.lane.b32.xlu0 %v707, 1
        %v711 = vpop.permute.xlu0 %710
        %712 = vrot.lane.b32.xlu0 %v706, 1
        %v713 = vpop.permute.xlu0 %712
        %vm714 = vcmask 7168
        %v715 = vsel %vm714, %v709, %v711
        %v716 = vsel %vm714, %v711, %v713
        %v719 = vsel %vm368, %v715, 0.0
        %v720 = vsel %vm369, %v716, 0.0
        %s721 = scalar_lea.vmem %s3, 12
        %v722 = vld [vmem:[%s721] sm:$0xf]
        %v724 = vsel %vm415, %v722, 0
        %v727 = vsel %vm419, %v719, 0
        %v730 = vsel %vm419, %v720, 0
        %732 = vmatprep.subr.mxu0 %v730
        %733 = vmatpush1.msra.mxu0 %v727
        %734 = vmatprep.subr.mxu0 0.0
        %735 = vmatpush1.msra.mxu0 0.0
        %736 = vmatprep.subr.mxu0 0.0
        %737 = vmatpush1.msra.mxu0 0.0
        %738 = vmatprep.subr.mxu0 0.0
        %739 = vmatpush1.msra.mxu0 0.0
        %740 = vmatprep.subr.mxu0 0.0
        %741 = vmatpush1.msra.mxu0 0.0
        %742 = vmatprep.subr.mxu0 0.0
        %743 = vmatpush1.msra.mxu0 0.0
        %744 = vmatprep.subr.mxu0 0.0
        %745 = vmatpush1.msra.mxu0 0.0
        %746 = vmatprep.subr.mxu0 0.0
        %747 = vmatpush1.msra.mxu0 0.0
        %748 = vmatprep.subr.mxu0 0.0
        %749 = vmatpush1.msra.mxu0 0.0
        %750 = vmatprep.subr.mxu0 0.0
        %751 = vmatpush1.msra.mxu0 0.0
        %752 = vmatprep.subr.mxu0 0.0
        %753 = vmatpush1.msra.mxu0 0.0
        %754 = vmatprep.subr.mxu0 0.0
        %755 = vmatpush1.msra.mxu0 0.0
        %756 = vmatprep.subr.mxu0 0.0
        %757 = vmatpush1.msra.mxu0 0.0
        %758 = vmatprep.subr.mxu0 0.0
        %759 = vmatpush1.msra.mxu0 0.0
        %760 = vmatprep.subr.mxu0 0.0
        %761 = vmatpush1.msra.mxu0 0.0
        %762 = vmatprep.subr.mxu0 0.0
        %763 = vmatpush1.msra.mxu0 0.0
        %764 = vmatprep.subr.mxu0 0.0
        %765 = vmatpush1.msra.mxu0 0.0
        %766 = vmatprep.subr.mxu0 0.0
        %767 = vmatpush1.msra.mxu0 0.0
        %768 = vmatprep.subr.mxu0 0.0
        %769 = vmatpush1.msra.mxu0 0.0
        %770 = vmatprep.subr.mxu0 0.0
        %771 = vmatpush1.msra.mxu0 0.0
        %772 = vmatprep.subr.mxu0 0.0
        %773 = vmatpush1.msra.mxu0 0.0
        %774 = vmatprep.subr.mxu0 0.0
        %775 = vmatpush1.msra.mxu0 0.0
        %776 = vmatprep.subr.mxu0 0.0
        %777 = vmatpush1.msra.mxu0 0.0
        %778 = vmatprep.subr.mxu0 0.0
        %779 = vmatpush1.msra.mxu0 0.0
        %780 = vmatprep.subr.mxu0 0.0
        %781 = vmatpush1.msra.mxu0 0.0
        %782 = vmatprep.subr.mxu0 0.0
        %783 = vmatpush1.msra.mxu0 0.0
        %784 = vmatprep.subr.mxu0 0.0
        %785 = vmatpush1.msra.mxu0 0.0
        %786 = vmatprep.subr.mxu0 0.0
        %787 = vmatpush1.msra.mxu0 0.0
        %788 = vmatprep.subr.mxu0 0.0
        %789 = vmatpush1.msra.mxu0 0.0
        %790 = vmatprep.subr.mxu0 0.0
        %791 = vmatpush1.msra.mxu0 0.0
        %792 = vmatprep.subr.mxu0 0.0
        %793 = vmatpush1.msra.mxu0 0.0
        %794 = vmatprep.subr.mxu0 0.0
        %795 = vmatpush1.msra.mxu0 0.0
        %796 = vmatprep.mubr.f32.mxu0 0.0
        %797 = vmatmul.mubr.f32.gmra.mrb[0].mxu0 %v724
        %v798 = vpop.f32.mrb[0].mxu0
        %v799 = vadd.f32 0.0, %v798
        %v800 = vpop.f32.mrb[0].mxu0
        %v801 = vadd.f32 0.0, %v800
        %802 = vdwg.mxu0
        %v803 = vadd.f32 %v688, %v799
        %v804 = vadd.f32 %v689, %v801
        %v805 = vld [vmem:[#allocation2 + $0x2] sm:$0xf]
        %s806 = scalar_lea.vmem %s3, 16
        %v807 = vld [vmem:[%s806] sm:$0xf]
        %v810 = vunpack.c.l.s4 1983009808
        %v811 = vunpack.c.0.s8 %v810
        %v812 = vlaneseq
        %v813 = vshrl.u32 %v812, 7
        %v814 = vsub.s32 %v811, %v813
        %v815 = vrot.slane %v805, %v814
        %v816 = vcombine.high %v815, %v815
        %v818 = vsel %vm415, %v807, 0
        %v820 = vsel %vm419, %v815, 0
        %v822 = vsel %vm419, %v816, 0
        %824 = vmatprep.subr.mxu0 %v822
        %825 = vmatpush1.msra.mxu0 %v820
        %826 = vmatprep.subr.mxu0 0.0
        %827 = vmatpush1.msra.mxu0 0.0
        %828 = vmatprep.subr.mxu0 0.0
        %829 = vmatpush1.msra.mxu0 0.0
        %830 = vmatprep.subr.mxu0 0.0
        %831 = vmatpush1.msra.mxu0 0.0
        %832 = vmatprep.subr.mxu0 0.0
        %833 = vmatpush1.msra.mxu0 0.0
        %834 = vmatprep.subr.mxu0 0.0
        %835 = vmatpush1.msra.mxu0 0.0
        %836 = vmatprep.subr.mxu0 0.0
        %837 = vmatpush1.msra.mxu0 0.0
        %838 = vmatprep.subr.mxu0 0.0
        %839 = vmatpush1.msra.mxu0 0.0
        %840 = vmatprep.subr.mxu0 0.0
        %841 = vmatpush1.msra.mxu0 0.0
        %842 = vmatprep.subr.mxu0 0.0
        %843 = vmatpush1.msra.mxu0 0.0
        %844 = vmatprep.subr.mxu0 0.0
        %845 = vmatpush1.msra.mxu0 0.0
        %846 = vmatprep.subr.mxu0 0.0
        %847 = vmatpush1.msra.mxu0 0.0
        %848 = vmatprep.subr.mxu0 0.0
        %849 = vmatpush1.msra.mxu0 0.0
        %850 = vmatprep.subr.mxu0 0.0
        %851 = vmatpush1.msra.mxu0 0.0
        %852 = vmatprep.subr.mxu0 0.0
        %853 = vmatpush1.msra.mxu0 0.0
        %854 = vmatprep.subr.mxu0 0.0
        %855 = vmatpush1.msra.mxu0 0.0
        %856 = vmatprep.subr.mxu0 0.0
        %857 = vmatpush1.msra.mxu0 0.0
        %858 = vmatprep.subr.mxu0 0.0
        %859 = vmatpush1.msra.mxu0 0.0
        %860 = vmatprep.subr.mxu0 0.0
        %861 = vmatpush1.msra.mxu0 0.0
        %862 = vmatprep.subr.mxu0 0.0
        %863 = vmatpush1.msra.mxu0 0.0
        %864 = vmatprep.subr.mxu0 0.0
        %865 = vmatpush1.msra.mxu0 0.0
        %866 = vmatprep.subr.mxu0 0.0
        %867 = vmatpush1.msra.mxu0 0.0
        %868 = vmatprep.subr.mxu0 0.0
        %869 = vmatpush1.msra.mxu0 0.0
        %870 = vmatprep.subr.mxu0 0.0
        %871 = vmatpush1.msra.mxu0 0.0
        %872 = vmatprep.subr.mxu0 0.0
        %873 = vmatpush1.msra.mxu0 0.0
        %874 = vmatprep.subr.mxu0 0.0
        %875 = vmatpush1.msra.mxu0 0.0
        %876 = vmatprep.subr.mxu0 0.0
        %877 = vmatpush1.msra.mxu0 0.0
        %878 = vmatprep.subr.mxu0 0.0
        %879 = vmatpush1.msra.mxu0 0.0
        %880 = vmatprep.subr.mxu0 0.0
        %881 = vmatpush1.msra.mxu0 0.0
        %882 = vmatprep.subr.mxu0 0.0
        %883 = vmatpush1.msra.mxu0 0.0
        %884 = vmatprep.subr.mxu0 0.0
        %885 = vmatpush1.msra.mxu0 0.0
        %886 = vmatprep.subr.mxu0 0.0
        %887 = vmatpush1.msra.mxu0 0.0
        %888 = vmatprep.mubr.f32.mxu0 0.0
        %889 = vmatmul.mubr.f32.gmra.mrb[0].mxu0 %v818
        %v890 = vpop.f32.mrb[0].mxu0
        %v891 = vadd.f32 0.0, %v890
        %v892 = vpop.f32.mrb[0].mxu0
        %v893 = vadd.f32 0.0, %v892
        %894 = vdwg.mxu0
        %v895 = vadd.f32 %v803, %v891
        %v896 = vadd.f32 %v804, %v893
        %v897 = vld [vmem:[#allocation2 + $0x2] sm:$0x3f]
        %v899 = vcombine.high %v897, %v897
        %v901 = vunpack.c.l.s4 1983009808
        %v902 = vunpack.c.0.s8 %v901
        %v903 = vlaneseq
        %v904 = vshrl.u32 %v903, 7
        %v905 = vsub.s32 %v902, %v904
        %v906 = vrot.slane %v897, %v905
        %v908 = vunpack.c.l.s4 1983009808
        %v909 = vunpack.c.0.s8 %v908
        %v910 = vlaneseq
        %v911 = vshrl.u32 %v910, 7
        %v912 = vsub.s32 %v909, %v911
        %v913 = vrot.slane %v899, %v912
        %v914 = vcombine.high %v906, %v906
        %915 = vrot.lane.b32.xlu0 %v906, 127
        %v916 = vpop.permute.xlu0 %915
        %917 = vrot.lane.b32.xlu0 %v914, 127
        %v918 = vpop.permute.xlu0 %917
        %919 = vrot.lane.b32.xlu0 %v913, 127
        %v920 = vpop.permute.xlu0 %919
        %vm921 = vcmask 1039360
        %v922 = vsel %vm921, %v916, %v918
        %v923 = vsel %vm921, %v918, %v920
        %v926 = vsel %vm370, %v922, 0.0
        %v927 = vsel %vm371, %v923, 0.0
        %s928 = scalar_lea.vmem %s3, 20
        %v929 = vld [vmem:[%s928] sm:$0xf]
        %v931 = vsel %vm415, %v929, 0
        %v934 = vsel %vm419, %v926, 0
        %v937 = vsel %vm419, %v927, 0
        %939 = vmatprep.subr.mxu0 %v937
        %940 = vmatpush1.msra.mxu0 %v934
        %941 = vmatprep.subr.mxu0 0.0
        %942 = vmatpush1.msra.mxu0 0.0
        %943 = vmatprep.subr.mxu0 0.0
        %944 = vmatpush1.msra.mxu0 0.0
        %945 = vmatprep.subr.mxu0 0.0
        %946 = vmatpush1.msra.mxu0 0.0
        %947 = vmatprep.subr.mxu0 0.0
        %948 = vmatpush1.msra.mxu0 0.0
        %949 = vmatprep.subr.mxu0 0.0
        %950 = vmatpush1.msra.mxu0 0.0
        %951 = vmatprep.subr.mxu0 0.0
        %952 = vmatpush1.msra.mxu0 0.0
        %953 = vmatprep.subr.mxu0 0.0
        %954 = vmatpush1.msra.mxu0 0.0
        %955 = vmatprep.subr.mxu0 0.0
        %956 = vmatpush1.msra.mxu0 0.0
        %957 = vmatprep.subr.mxu0 0.0
        %958 = vmatpush1.msra.mxu0 0.0
        %959 = vmatprep.subr.mxu0 0.0
        %960 = vmatpush1.msra.mxu0 0.0
        %961 = vmatprep.subr.mxu0 0.0
        %962 = vmatpush1.msra.mxu0 0.0
        %963 = vmatprep.subr.mxu0 0.0
        %964 = vmatpush1.msra.mxu0 0.0
        %965 = vmatprep.subr.mxu0 0.0
        %966 = vmatpush1.msra.mxu0 0.0
        %967 = vmatprep.subr.mxu0 0.0
        %968 = vmatpush1.msra.mxu0 0.0
        %969 = vmatprep.subr.mxu0 0.0
        %970 = vmatpush1.msra.mxu0 0.0
        %971 = vmatprep.subr.mxu0 0.0
        %972 = vmatpush1.msra.mxu0 0.0
        %973 = vmatprep.subr.mxu0 0.0
        %974 = vmatpush1.msra.mxu0 0.0
        %975 = vmatprep.subr.mxu0 0.0
        %976 = vmatpush1.msra.mxu0 0.0
        %977 = vmatprep.subr.mxu0 0.0
        %978 = vmatpush1.msra.mxu0 0.0
        %979 = vmatprep.subr.mxu0 0.0
        %980 = vmatpush1.msra.mxu0 0.0
        %981 = vmatprep.subr.mxu0 0.0
        %982 = vmatpush1.msra.mxu0 0.0
        %983 = vmatprep.subr.mxu0 0.0
        %984 = vmatpush1.msra.mxu0 0.0
        %985 = vmatprep.subr.mxu0 0.0
        %986 = vmatpush1.msra.mxu0 0.0
        %987 = vmatprep.subr.mxu0 0.0
        %988 = vmatpush1.msra.mxu0 0.0
        %989 = vmatprep.subr.mxu0 0.0
        %990 = vmatpush1.msra.mxu0 0.0
        %991 = vmatprep.subr.mxu0 0.0
        %992 = vmatpush1.msra.mxu0 0.0
        %993 = vmatprep.subr.mxu0 0.0
        %994 = vmatpush1.msra.mxu0 0.0
        %995 = vmatprep.subr.mxu0 0.0
        %996 = vmatpush1.msra.mxu0 0.0
        %997 = vmatprep.subr.mxu0 0.0
        %998 = vmatpush1.msra.mxu0 0.0
        %999 = vmatprep.subr.mxu0 0.0
        %1000 = vmatpush1.msra.mxu0 0.0
        %1001 = vmatprep.subr.mxu0 0.0
        %1002 = vmatpush1.msra.mxu0 0.0
        %1003 = vmatprep.mubr.f32.mxu0 0.0
        %1004 = vmatmul.mubr.f32.gmra.mrb[0].mxu0 %v931
        %v1005 = vpop.f32.mrb[0].mxu0
        %v1006 = vadd.f32 0.0, %v1005
        %v1007 = vpop.f32.mrb[0].mxu0
        %v1008 = vadd.f32 0.0, %v1007
        %1009 = vdwg.mxu0
        %v1010 = vadd.f32 %v895, %v1006
        %v1011 = vadd.f32 %v896, %v1008
        %v1012 = vld [vmem:[#allocation2 + $0x2] sm:$0x3f]
        %v1014 = vcombine.high %v1012, %v1012
        %v1016 = vunpack.c.l.s4 1983009808
        %v1017 = vunpack.c.0.s8 %v1016
        %v1018 = vlaneseq
        %v1019 = vshrl.u32 %v1018, 7
        %v1020 = vsub.s32 %v1017, %v1019
        %v1021 = vrot.slane %v1012, %v1020
        %v1023 = vunpack.c.l.s4 1983009808
        %v1024 = vunpack.c.0.s8 %v1023
        %v1025 = vlaneseq
        %v1026 = vshrl.u32 %v1025, 7
        %v1027 = vsub.s32 %v1024, %v1026
        %v1028 = vrot.slane %v1014, %v1027
        %v1029 = vcombine.high %v1021, %v1021
        %1030 = vrot.lane.b32.xlu0 %v1021, 113
        %v1031 = vpop.permute.xlu0 %1030
        %1032 = vrot.lane.b32.xlu0 %v1029, 113
        %v1033 = vpop.permute.xlu0 %1032
        %1034 = vrot.lane.b32.xlu0 %v1028, 113
        %v1035 = vpop.permute.xlu0 %1034
        %vm1036 = vcmask 924672
        %v1037 = vsel %vm1036, %v1031, %v1033
        %v1038 = vsel %vm1036, %v1033, %v1035
        %v1041 = vsel %vm368, %v1037, 0.0
        %v1042 = vsel %vm369, %v1038, 0.0
        %s1043 = scalar_lea.vmem %s3, 24
        %v1044 = vld [vmem:[%s1043] sm:$0xf]
        %v1046 = vsel %vm415, %v1044, 0
        %v1049 = vsel %vm419, %v1041, 0
        %v1052 = vsel %vm419, %v1042, 0
        %1054 = vmatprep.subr.mxu0 %v1052
        %1055 = vmatpush1.msra.mxu0 %v1049
        %1056 = vmatprep.subr.mxu0 0.0
        %1057 = vmatpush1.msra.mxu0 0.0
        %1058 = vmatprep.subr.mxu0 0.0
        %1059 = vmatpush1.msra.mxu0 0.0
        %1060 = vmatprep.subr.mxu0 0.0
        %1061 = vmatpush1.msra.mxu0 0.0
        %1062 = vmatprep.subr.mxu0 0.0
        %1063 = vmatpush1.msra.mxu0 0.0
        %1064 = vmatprep.subr.mxu0 0.0
        %1065 = vmatpush1.msra.mxu0 0.0
        %1066 = vmatprep.subr.mxu0 0.0
        %1067 = vmatpush1.msra.mxu0 0.0
        %1068 = vmatprep.subr.mxu0 0.0
        %1069 = vmatpush1.msra.mxu0 0.0
        %1070 = vmatprep.subr.mxu0 0.0
        %1071 = vmatpush1.msra.mxu0 0.0
        %1072 = vmatprep.subr.mxu0 0.0
        %1073 = vmatpush1.msra.mxu0 0.0
        %1074 = vmatprep.subr.mxu0 0.0
        %1075 = vmatpush1.msra.mxu0 0.0
        %1076 = vmatprep.subr.mxu0 0.0
        %1077 = vmatpush1.msra.mxu0 0.0
        %1078 = vmatprep.subr.mxu0 0.0
        %1079 = vmatpush1.msra.mxu0 0.0
        %1080 = vmatprep.subr.mxu0 0.0
        %1081 = vmatpush1.msra.mxu0 0.0
        %1082 = vmatprep.subr.mxu0 0.0
        %1083 = vmatpush1.msra.mxu0 0.0
        %1084 = vmatprep.subr.mxu0 0.0
        %1085 = vmatpush1.msra.mxu0 0.0
        %1086 = vmatprep.subr.mxu0 0.0
        %1087 = vmatpush1.msra.mxu0 0.0
        %1088 = vmatprep.subr.mxu0 0.0
        %1089 = vmatpush1.msra.mxu0 0.0
        %1090 = vmatprep.subr.mxu0 0.0
        %1091 = vmatpush1.msra.mxu0 0.0
        %1092 = vmatprep.subr.mxu0 0.0
        %1093 = vmatpush1.msra.mxu0 0.0
        %1094 = vmatprep.subr.mxu0 0.0
        %1095 = vmatpush1.msra.mxu0 0.0
        %1096 = vmatprep.subr.mxu0 0.0
        %1097 = vmatpush1.msra.mxu0 0.0
        %1098 = vmatprep.subr.mxu0 0.0
        %1099 = vmatpush1.msra.mxu0 0.0
        %1100 = vmatprep.subr.mxu0 0.0
        %1101 = vmatpush1.msra.mxu0 0.0
        %1102 = vmatprep.subr.mxu0 0.0
        %1103 = vmatpush1.msra.mxu0 0.0
        %1104 = vmatprep.subr.mxu0 0.0
        %1105 = vmatpush1.msra.mxu0 0.0
        %1106 = vmatprep.subr.mxu0 0.0
        %1107 = vmatpush1.msra.mxu0 0.0
        %1108 = vmatprep.subr.mxu0 0.0
        %1109 = vmatpush1.msra.mxu0 0.0
        %1110 = vmatprep.subr.mxu0 0.0
        %1111 = vmatpush1.msra.mxu0 0.0
        %1112 = vmatprep.subr.mxu0 0.0
        %1113 = vmatpush1.msra.mxu0 0.0
        %1114 = vmatprep.subr.mxu0 0.0
        %1115 = vmatpush1.msra.mxu0 0.0
        %1116 = vmatprep.subr.mxu0 0.0
        %1117 = vmatpush1.msra.mxu0 0.0
        %1118 = vmatprep.mubr.f32.mxu0 0.0
        %1119 = vmatmul.mubr.f32.gmra.mrb[0].mxu0 %v1046
        %v1120 = vpop.f32.mrb[0].mxu0
        %v1121 = vadd.f32 0.0, %v1120
        %v1122 = vpop.f32.mrb[0].mxu0
        %v1123 = vadd.f32 0.0, %v1122
        %1124 = vdwg.mxu0
        %v1125 = vadd.f32 %v1010, %v1121
        %v1126 = vadd.f32 %v1011, %v1123
        %v1127 = vld [vmem:[#allocation2 + $0x2] sm:$0x3f]
        %s1128 = scalar_lea.vmem %s3, 28
        %v1129 = vld [vmem:[%s1128] sm:$0xf]
        %v1131 = vcombine.high %v1127, %v1127
        %v1133 = vunpack.c.l.s4 1983009808
        %v1134 = vunpack.c.0.s8 %v1133
        %v1135 = vlaneseq
        %v1136 = vshrl.u32 %v1135, 7
        %v1137 = vsub.s32 %v1134, %v1136
        %v1138 = vrot.slane %v1127, %v1137
        %v1140 = vunpack.c.l.s4 1983009808
        %v1141 = vunpack.c.0.s8 %v1140
        %v1142 = vlaneseq
        %v1143 = vshrl.u32 %v1142, 7
        %v1144 = vsub.s32 %v1141, %v1143
        %v1145 = vrot.slane %v1131, %v1144
        %v1146 = vcombine.high %v1138, %v1138
        %1147 = vrot.lane.b32.xlu0 %v1138, 112
        %v1148 = vpop.permute.xlu0 %1147
        %1149 = vrot.lane.b32.xlu0 %v1146, 112
        %v1150 = vpop.permute.xlu0 %1149
        %1151 = vrot.lane.b32.xlu0 %v1145, 112
        %v1152 = vpop.permute.xlu0 %1151
        %vm1153 = vcmask 916480
        %v1154 = vsel %vm1153, %v1148, %v1150
        %v1155 = vsel %vm1153, %v1150, %v1152
        %v1157 = vsel %vm415, %v1129, 0
        %v1159 = vsel %vm419, %v1154, 0
        %v1161 = vsel %vm419, %v1155, 0
        %1163 = vmatprep.subr.mxu0 %v1161
        %1164 = vmatpush1.msra.mxu0 %v1159
        %1165 = vmatprep.subr.mxu0 0.0
        %1166 = vmatpush1.msra.mxu0 0.0
        %1167 = vmatprep.subr.mxu0 0.0
        %1168 = vmatpush1.msra.mxu0 0.0
        %1169 = vmatprep.subr.mxu0 0.0
        %1170 = vmatpush1.msra.mxu0 0.0
        %1171 = vmatprep.subr.mxu0 0.0
        %1172 = vmatpush1.msra.mxu0 0.0
        %1173 = vmatprep.subr.mxu0 0.0
        %1174 = vmatpush1.msra.mxu0 0.0
        %1175 = vmatprep.subr.mxu0 0.0
        %1176 = vmatpush1.msra.mxu0 0.0
        %1177 = vmatprep.subr.mxu0 0.0
        %1178 = vmatpush1.msra.mxu0 0.0
        %1179 = vmatprep.subr.mxu0 0.0
        %1180 = vmatpush1.msra.mxu0 0.0
        %1181 = vmatprep.subr.mxu0 0.0
        %1182 = vmatpush1.msra.mxu0 0.0
        %1183 = vmatprep.subr.mxu0 0.0
        %1184 = vmatpush1.msra.mxu0 0.0
        %1185 = vmatprep.subr.mxu0 0.0
        %1186 = vmatpush1.msra.mxu0 0.0
        %1187 = vmatprep.subr.mxu0 0.0
        %1188 = vmatpush1.msra.mxu0 0.0
        %1189 = vmatprep.subr.mxu0 0.0
        %1190 = vmatpush1.msra.mxu0 0.0
        %1191 = vmatprep.subr.mxu0 0.0
        %1192 = vmatpush1.msra.mxu0 0.0
        %1193 = vmatprep.subr.mxu0 0.0
        %1194 = vmatpush1.msra.mxu0 0.0
        %1195 = vmatprep.subr.mxu0 0.0
        %1196 = vmatpush1.msra.mxu0 0.0
        %1197 = vmatprep.subr.mxu0 0.0
        %1198 = vmatpush1.msra.mxu0 0.0
        %1199 = vmatprep.subr.mxu0 0.0
        %1200 = vmatpush1.msra.mxu0 0.0
        %1201 = vmatprep.subr.mxu0 0.0
        %1202 = vmatpush1.msra.mxu0 0.0
        %1203 = vmatprep.subr.mxu0 0.0
        %1204 = vmatpush1.msra.mxu0 0.0
        %1205 = vmatprep.subr.mxu0 0.0
        %1206 = vmatpush1.msra.mxu0 0.0
        %1207 = vmatprep.subr.mxu0 0.0
        %1208 = vmatpush1.msra.mxu0 0.0
        %1209 = vmatprep.subr.mxu0 0.0
        %1210 = vmatpush1.msra.mxu0 0.0
        %1211 = vmatprep.subr.mxu0 0.0
        %1212 = vmatpush1.msra.mxu0 0.0
        %1213 = vmatprep.subr.mxu0 0.0
        %1214 = vmatpush1.msra.mxu0 0.0
        %1215 = vmatprep.subr.mxu0 0.0
        %1216 = vmatpush1.msra.mxu0 0.0
        %1217 = vmatprep.subr.mxu0 0.0
        %1218 = vmatpush1.msra.mxu0 0.0
        %1219 = vmatprep.subr.mxu0 0.0
        %1220 = vmatpush1.msra.mxu0 0.0
        %1221 = vmatprep.subr.mxu0 0.0
        %1222 = vmatpush1.msra.mxu0 0.0
        %1223 = vmatprep.subr.mxu0 0.0
        %1224 = vmatpush1.msra.mxu0 0.0
        %1225 = vmatprep.subr.mxu0 0.0
        %1226 = vmatpush1.msra.mxu0 0.0
        %1227 = vmatprep.mubr.f32.mxu0 0.0
        %1228 = vmatmul.mubr.f32.gmra.mrb[0].mxu0 %v1157
        %v1229 = vpop.f32.mrb[0].mxu0
        %v1230 = vadd.f32 0.0, %v1229
        %v1231 = vpop.f32.mrb[0].mxu0
        %v1232 = vadd.f32 0.0, %v1231
        %1233 = vdwg.mxu0
        %v1234 = vadd.f32 %v1125, %v1230
        %v1235 = vadd.f32 %v1126, %v1232
        %v1236 = vld [vmem:[#allocation2 + $0x2] sm:$0x3f]
        %v1238 = vcombine.high %v1236, %v1236
        %v1240 = vunpack.c.l.s4 1983009808
        %v1241 = vunpack.c.0.s8 %v1240
        %v1242 = vlaneseq
        %v1243 = vshrl.u32 %v1242, 7
        %v1244 = vsub.s32 %v1241, %v1243
        %v1245 = vrot.slane %v1236, %v1244
        %v1247 = vunpack.c.l.s4 1983009808
        %v1248 = vunpack.c.0.s8 %v1247
        %v1249 = vlaneseq
        %v1250 = vshrl.u32 %v1249, 7
        %v1251 = vsub.s32 %v1248, %v1250
        %v1252 = vrot.slane %v1238, %v1251
        %v1253 = vcombine.high %v1245, %v1245
        %1254 = vrot.lane.b32.xlu0 %v1245, 111
        %v1255 = vpop.permute.xlu0 %1254
        %1256 = vrot.lane.b32.xlu0 %v1253, 111
        %v1257 = vpop.permute.xlu0 %1256
        %1258 = vrot.lane.b32.xlu0 %v1252, 111
        %v1259 = vpop.permute.xlu0 %1258
        %vm1260 = vcmask 908288
        %v1261 = vsel %vm1260, %v1255, %v1257
        %v1262 = vsel %vm1260, %v1257, %v1259
        %v1265 = vsel %vm370, %v1261, 0.0
        %v1266 = vsel %vm371, %v1262, 0.0
        %s1267 = scalar_lea.vmem %s3, 32
        %v1268 = vld [vmem:[%s1267] sm:$0xf]
        %v1270 = vsel %vm415, %v1268, 0
        %v1273 = vsel %vm419, %v1265, 0
        %v1276 = vsel %vm419, %v1266, 0
        %1278 = vmatprep.subr.mxu0 %v1276
        %1279 = vmatpush1.msra.mxu0 %v1273
        %1280 = vmatprep.subr.mxu0 0.0
        %1281 = vmatpush1.msra.mxu0 0.0
        %1282 = vmatprep.subr.mxu0 0.0
        %1283 = vmatpush1.msra.mxu0 0.0
        %1284 = vmatprep.subr.mxu0 0.0
        %1285 = vmatpush1.msra.mxu0 0.0
        %1286 = vmatprep.subr.mxu0 0.0
        %1287 = vmatpush1.msra.mxu0 0.0
        %1288 = vmatprep.subr.mxu0 0.0
        %1289 = vmatpush1.msra.mxu0 0.0
        %1290 = vmatprep.subr.mxu0 0.0
        %1291 = vmatpush1.msra.mxu0 0.0
        %1292 = vmatprep.subr.mxu0 0.0
        %1293 = vmatpush1.msra.mxu0 0.0
        %1294 = vmatprep.subr.mxu0 0.0
        %1295 = vmatpush1.msra.mxu0 0.0
        %1296 = vmatprep.subr.mxu0 0.0
        %1297 = vmatpush1.msra.mxu0 0.0
        %1298 = vmatprep.subr.mxu0 0.0
        %1299 = vmatpush1.msra.mxu0 0.0
        %1300 = vmatprep.subr.mxu0 0.0
        %1301 = vmatpush1.msra.mxu0 0.0
        %1302 = vmatprep.subr.mxu0 0.0
        %1303 = vmatpush1.msra.mxu0 0.0
        %1304 = vmatprep.subr.mxu0 0.0
        %1305 = vmatpush1.msra.mxu0 0.0
        %1306 = vmatprep.subr.mxu0 0.0
        %1307 = vmatpush1.msra.mxu0 0.0
        %1308 = vmatprep.subr.mxu0 0.0
        %1309 = vmatpush1.msra.mxu0 0.0
        %1310 = vmatprep.subr.mxu0 0.0
        %1311 = vmatpush1.msra.mxu0 0.0
        %1312 = vmatprep.subr.mxu0 0.0
        %1313 = vmatpush1.msra.mxu0 0.0
        %1314 = vmatprep.subr.mxu0 0.0
        %1315 = vmatpush1.msra.mxu0 0.0
        %1316 = vmatprep.subr.mxu0 0.0
        %1317 = vmatpush1.msra.mxu0 0.0
        %1318 = vmatprep.subr.mxu0 0.0
        %1319 = vmatpush1.msra.mxu0 0.0
        %1320 = vmatprep.subr.mxu0 0.0
        %1321 = vmatpush1.msra.mxu0 0.0
        %1322 = vmatprep.subr.mxu0 0.0
        %1323 = vmatpush1.msra.mxu0 0.0
        %1324 = vmatprep.subr.mxu0 0.0
        %1325 = vmatpush1.msra.mxu0 0.0
        %1326 = vmatprep.subr.mxu0 0.0
        %1327 = vmatpush1.msra.mxu0 0.0
        %1328 = vmatprep.subr.mxu0 0.0
        %1329 = vmatpush1.msra.mxu0 0.0
        %1330 = vmatprep.subr.mxu0 0.0
        %1331 = vmatpush1.msra.mxu0 0.0
        %1332 = vmatprep.subr.mxu0 0.0
        %1333 = vmatpush1.msra.mxu0 0.0
        %1334 = vmatprep.subr.mxu0 0.0
        %1335 = vmatpush1.msra.mxu0 0.0
        %1336 = vmatprep.subr.mxu0 0.0
        %1337 = vmatpush1.msra.mxu0 0.0
        %1338 = vmatprep.subr.mxu0 0.0
        %1339 = vmatpush1.msra.mxu0 0.0
        %1340 = vmatprep.subr.mxu0 0.0
        %1341 = vmatpush1.msra.mxu0 0.0
        %1342 = vmatprep.mubr.f32.mxu0 0.0
        %1343 = vmatmul.mubr.f32.gmra.mrb[0].mxu0 %v1270
        %v1344 = vpop.f32.mrb[0].mxu0
        %v1345 = vadd.f32 0.0, %v1344
        %v1346 = vpop.f32.mrb[0].mxu0
        %v1347 = vadd.f32 0.0, %v1346
        %1348 = vdwg.mxu0
        %v1349 = vadd.f32 %v1234, %v1345
        %v1350 = vadd.f32 %v1235, %v1347
        %v1351 = vld [vmem:[%s4] sm:$0xf]
        %1353 = vset.pattern.permute.xlu0 0
        %1354 = vperm.xlu0 %1353, %v1351
        %v1355 = vpop.permute.xlu0 %1354
        %v1357 = vadd.f32 %v1349, %v1355
        %v1358 = vadd.f32 %v1350, %v1355
        %v1359 = vxor.u32 %v1357, 2147483648
        %v1360 = vxor.u32 %v1358, 2147483648
        %v1361 = vmul.f32 %v1359, 1.442695
        %v1362 = vpow.pop %v1361
        %v1363 = vmul.f32 %v1360, 1.442695
        %v1364 = vpow.pop %v1363
        %v1365 = vadd.f32 %v1362, 1.0
        %v1366 = vadd.f32 %v1364, 1.0
        %v1367 = vrcp.pop %v1365
        %v1368 = vmul.f32 1.0, %v1367
        %v1369 = vrcp.pop %v1366
        %v1370 = vmul.f32 1.0, %v1369
        %v1371 = vmul.f32 %v1357, %v1368
        %v1372 = vmul.f32 %v1358, %v1370
        %v1374 = vadd.f32 %v1371, %v223
        %v1375 = vadd.f32 %v1372, %v232
        %v1378 = vcombine.low %v1374, %v1375
        %1380 = vst [vmem:[%s217] sm:$0xff] %v1378
        %s1381 = sand.u32 %s137, 1
        %s1382 = scalar_lea.sflag [#allocation4], %s1381
        %s1383 = sand.u32 %s137, 1
        %s1384 = smul.addr %s1383, 8
        %s1385 = scalar_lea.vmem [#allocation3], %s1384
        // Predicated region
        $region41: #{tpu_custom_call.1} parent=39 // pred_check
          %p1386 = pneg %p147
        $region42: #{tpu_custom_call.1} parent=39 // pred_check_branch
          %1388 = sbr.rel (%p1386) target = $region44
        $region43: #{tpu_custom_call.1} parent=39 // pred_region
          %s1390 = ssub.s32 128, 128
          %1391 = vsyncadd %s1382, %s1390
          %s1392 = smul.addr %s19, 2
          %s1393 = smul.addr %s1392, 64
          %s1394 = scalar_lea.hbm %s5, %s1393
          %s1396 = sshll.u32 %s1385, 4
          %s1397 = int_to_ptr.vmem [resolvable:$true] %s1396
          %1399 = dma.vmem_to_hbm [thread:$0]  %s1397, 128, %s1394, %s1382
        $region44: #{tpu_custom_call.1} parent=39 // pred_fallthru
          _
      $region40: #{tpu_custom_call.1} parent=5 // pred_fallthru
        _
      %p1400 = scmp.le.s32.totalorder 2, %s14
      // Predicated region
      $region45: #{tpu_custom_call.1} parent=5 // pred_check
        %p1401 = pneg %p1400
      $region46: #{tpu_custom_call.1} parent=5 // pred_check_branch
        %1403 = sbr.rel (%p1401) target = $region48
      $region47: #{tpu_custom_call.1} parent=5 // pred_region
        %s1404 = ssub.s32 %s14, 2
        // Predicated region
        $region49: #{tpu_custom_call.1} parent=47 // pred_check
          %p1405 = pneg %p153
        $region50: #{tpu_custom_call.1} parent=47 // pred_check_branch
          %1407 = sbr.rel (%p1405) target = $region52
        $region51: #{tpu_custom_call.1} parent=47 // pred_region
          %s1408 = sand.u32 %s138, 1
          %s1409 = scalar_lea.sflag [#allocation4], %s1408
          %s1410 = sand.u32 %s138, 1
          %s1411 = smul.addr %s1410, 8
          %s1412 = scalar_lea.vmem [#allocation3], %s1411
          %1413 = dma.done %s1409, 128
        $region52: #{tpu_custom_call.1} parent=47 // pred_fallthru
          _
      $region48: #{tpu_custom_call.1} parent=5 // pred_fallthru
        _
    $region6: #{tpu_custom_call.1} parent=1 // loop_footer
      %s18 = sadd.s32 1, %s14
    $region7: #{tpu_custom_call.1} parent=1 // loop_footer_branch
      %13 = sbr.rel target = $region3
    $region8: #{tpu_custom_call.1} parent=1 // loop_exit
      _
    %1414 = vsyncpa [#allocation4], 1
    %s1415 = scalar_lea.sflag [#allocation4], 1
    %1416 = vsyncpa %s1415, 1

</llo_original>
